<compile_context>
chip_gen: v6e
topology: v6e:2x2x1
jax: 0.10.0
libtpu: 0.0.40
codegen_flags: <defaults>
</compile_context>

<pallas_src>
import functools

import numpy as np
import jax
import jax.numpy as jnp
from jax.experimental import pallas as pl
from jax.experimental.pallas import tpu as pltpu


# ----------------------------------------------------------------------------
# Kernel: full VAE forward on one (tb, D) batch tile.
# ----------------------------------------------------------------------------
def _vae_kernel(
    x_ref, eps_ref, mask_ref,
    we_ref, be_ref,            # shared encoder Linear (D -> H), gather folded in
    wh_ref, bh_ref,            # fused [log_var | mu] heads (H -> 2L)
    wdz_ref, wdi_ref, bd_ref,  # decoder Linear, split: z @ wd_z + x @ wd_imm
    wo_ref, bo_ref,            # output Linear (H -> D), scatter folded in
    out_ref,
    *, n_feat, latent,
):
    f32 = jnp.float32
    x = x_ref[...]                                   # (tb, D) full feature rows

    # Shared encoder + ReLU (immutable rows of we_full are zero).
    h = jnp.dot(x, we_ref[...], preferred_element_type=f32) + be_ref[...]
    h = jnp.maximum(h, 0.0)

    # Fused heads, ordered [log_var | mu]: lv is lane-0 aligned with eps so the
    # exp/mul chain needs no cross-lane realign (mu feeds the MXU, which does
    # not care about lane position).
    heads = jnp.dot(h, wh_ref[...], preferred_element_type=f32) + bh_ref[...]
    lv = heads[:, :latent]
    mu = heads[:, latent:latent + latent]

    # Reparametrization trick: z = mu + exp(0.5 * log_var) * eps
    z = mu + jnp.exp(0.5 * lv) * eps_ref[...]

    # Decoder: concat([z, x_imm]) @ wd  ==  z @ wd_z + x @ wd_imm  (+ bias).
    # TODO(synk): wmu@wd_z could be folded into the heads matmul to shorten the
    # serial MXU chain, but that reassociates the mu path; kept exact.
    hd = (jnp.dot(z, wdz_ref[...], preferred_element_type=f32)
          + jnp.dot(x, wdi_ref[...], preferred_element_type=f32)
          + bd_ref[...])
    hd = jnp.maximum(hd, 0.0)

    # Output layer scattered to full feature width (immutable columns zero).
    logits = jnp.dot(hd, wo_ref[...], preferred_element_type=f32) + bo_ref[...]
    # TODO(synk): pl.reciprocal(..., approx=True) would move the divide to the
    # EUP, but the approx path misses the 1e-5 reference tolerance; keep exact.
    recon = 1.0 / (1.0 + jnp.exp(-logits))           # sigmoid

    # x[:, mutable] = recon  -- mask blend replaces the wrapper-side scatter.
    m = mask_ref[...]                                # (1, D): 1.0 on mutable cols
    x_out = m * recon + (1.0 - m) * x

    # Lane-dense packed output [ x_out (D) | mu (L) | lv (L) | stale pad ].
    # Sub-slice stores avoid materializing a (tb, 128) concat + zero pad in
    # vregs; the pad lanes carry stale VMEM to HBM and are discarded by the
    # wrapper, which is harmless.
    out_ref[:, :n_feat] = x_out
    out_ref[:, n_feat:n_feat + latent] = mu
    out_ref[:, n_feat + latent:n_feat + 2 * latent] = lv


# ----------------------------------------------------------------------------
# One-time (model-build) parameter folding. NOT on the per-call path.
# ----------------------------------------------------------------------------
def fold_vae_params(params, mutable_mask):
    """Fold the mutable/immutable column gather + scatter of the PyTorch
    forward into static zero-padded weight layouts. Call once and reuse."""
    mutable_mask = np.asarray(mutable_mask, dtype=bool)
    D = mutable_mask.shape[0]
    mut_idx = np.nonzero(mutable_mask)[0]
    imm_idx = np.nonzero(~mutable_mask)[0]

    we, be, wmu, bmu, wlv, blv, wd, bd, wo, bo = params
    H = we.shape[1]
    L = wmu.shape[1]

    we_full = jnp.zeros((D, H), jnp.float32).at[mut_idx, :].set(we)
    # log_var first so lv is lane-0 aligned with eps inside the kernel.
    wh = jnp.concatenate([wlv, wmu], axis=1)               # (H, 2L)
    bh = jnp.concatenate([blv, bmu], axis=1)               # (1, 2L)
    wd_z = wd[:L, :]                                        # (L, H)
    wd_imm = jnp.zeros((D, H), jnp.float32).at[imm_idx, :].set(wd[L:, :])
    wo_full = jnp.zeros((H, D), jnp.float32).at[:, mut_idx].set(wo)
    bo_full = jnp.zeros((1, D), jnp.float32).at[:, mut_idx].set(bo)
    mask_row = jnp.asarray(mutable_mask, jnp.float32).reshape(1, D)

    return (mask_row, we_full, be, wh, bh, wd_z, wd_imm, bd, wo_full, bo_full)


def _round_up(v, m):
    return ((v + m - 1) // m) * m


def _choose_tile(B, max_tb=4096):
    """Fewest grid steps while keeping >=2 steps whenever B allows (one tile
    per v7x TensorCore); rows rounded to the 8-sublane granule; capped so the
    double-buffered working set stays well under the scoped-VMEM default."""
    tb = _round_up(max(-(-B // 2), 8), 8)
    tb = min(tb, max_tb)
    steps = -(-B // tb)
    return tb, steps


# ----------------------------------------------------------------------------
# Forward wrapper: pad batch, pallas_call, unpack. Jitted so pad/slice fuse.
# ----------------------------------------------------------------------------
@jax.jit
def vae_forward(x, eps, folded_params):
    """Returns (x_with_reconstruction, mu_z, log_var_z)."""
    (mask_row, we_full, be, wh, bh,
     wd_z, wd_imm, bd, wo_full, bo_full) = folded_params

    x = x.astype(jnp.float32)
    eps = eps.astype(jnp.float32)
    B, D = x.shape
    L = eps.shape[1]
    out_w = max(128, _round_up(D + 2 * L, 128))     # lane-dense output slab

    tb, steps = _choose_tile(B)
    Bp = steps * tb
    if Bp != B:
        x_p = jnp.pad(x, ((0, Bp - B), (0, 0)))
        eps_p = jnp.pad(eps, ((0, Bp - B), (0, 0)))
    else:
        x_p, eps_p = x, eps

    def batch_spec(width):
        return pl.BlockSpec((tb, width), lambda i: (i, 0))

    def full_spec(arr):
        # Constant block index -> fetched once, stays VMEM-resident across steps.
        return pl.BlockSpec(tuple(arr.shape), lambda i: (0, 0))

    kernel = functools.partial(_vae_kernel, n_feat=D, latent=L)

    packed = pl.pallas_call(
        kernel,
        out_shape=jax.ShapeDtypeStruct((Bp, out_w), jnp.float32),
        grid=(steps,),
        in_specs=[
            batch_spec(D),                   # x
            batch_spec(L),                   # eps
            full_spec(mask_row),
            full_spec(we_full), full_spec(be),
            full_spec(wh), full_spec(bh),
            full_spec(wd_z), full_spec(wd_imm), full_spec(bd),
            full_spec(wo_full), full_spec(bo_full),
        ],
        out_specs=batch_spec(out_w),
        compiler_params=pltpu.CompilerParams(
            dimension_semantics=("parallel",)),
    )(x_p, eps_p, mask_row, we_full, be, wh, bh, wd_z, wd_imm, bd,
      wo_full, bo_full)

    x_out = packed[:B, :D]
    mu = packed[:B, D:D + L]
    lv = packed[:B, D + L:D + 2 * L]
    return x_out, mu, lv


# ----------------------------------------------------------------------------
# Deterministic PyTorch-style Linear init (uniform +-1/sqrt(fan_in)).
# Weights stored as (in, out) = torch_weight.T
# ----------------------------------------------------------------------------
def init_linear(key, fan_in, fan_out):
    kw, kb = jax.random.split(key)
    bound = 1.0 / np.sqrt(fan_in)
    w = jax.random.uniform(kw, (fan_in, fan_out), jnp.float32, -bound, bound)
    b = jax.random.uniform(kb, (1, fan_out), jnp.float32, -bound, bound)
    return w, b


if __name__ == "__main__":
    # layers = [16, 32, 8]: 16 mutable input features, hidden 32, latent 8.
    # Total tabular width D = 24 (16 mutable + 8 immutable).
    B = 300                    # not a tile multiple -> exercises padding + grid=(2,)
    D = 24
    mutable_mask = (np.arange(D) % 3) != 2        # 16 mutable, 8 immutable
    n_mut = int(mutable_mask.sum())
    n_imm = D - n_mut
    H, L = 32, 8
    Lc = L + n_imm             # decoder input: layers[-1] += sum(~mutable_mask)

    key = jax.random.PRNGKey(0)
    keys = jax.random.split(key, 8)

    we, be = init_linear(keys[0], n_mut, H)       # shared encoder
    wmu, bmu = init_linear(keys[1], H, L)         # mu head
    wlv, blv = init_linear(keys[2], H, L)         # log_var head
    wd, bd = init_linear(keys[3], Lc, H)          # decoder
    wo, bo = init_linear(keys[4], H, n_mut)       # output + sigmoid
    params = (we, be, wmu, bmu, wlv, blv, wd, bd, wo, bo)

    # One-time folding at "model build" time -- not on the per-call path.
    folded = fold_vae_params(params, mutable_mask)
    folded = jax.block_until_ready(folded)

    x = jax.random.uniform(keys[5], (B, D), jnp.float32)       # data in [0, 1]
    eps = jax.random.normal(keys[6], (B, L), jnp.float32)      # randn_like(std)
    # TODO(synk): eps could be drawn in-kernel (pltpu.prng_seed + stateful_normal);
    # kept as an input so the run stays bit-checkable against the JAX reference.

    x_out, mu_z, log_var_z = vae_forward(x, eps, folded)
    jax.block_until_ready((x_out, mu_z, log_var_z))

    # Pure-JAX reference of the original (gather / concat / scatter) formulation.
    mut_idx = np.nonzero(mutable_mask)[0]
    imm_idx = np.nonzero(~mutable_mask)[0]
    xm, xi = x[:, mut_idx], x[:, imm_idx]
    h = jnp.maximum(xm @ we + be, 0.0)
    mu_ref = h @ wmu + bmu
    lv_ref = h @ wlv + blv
    z = mu_ref + jnp.exp(0.5 * lv_ref) * eps
    zc = jnp.concatenate([z, xi], axis=-1)
    hd = jnp.maximum(zc @ wd + bd, 0.0)
    recon_ref = 1.0 / (1.0 + jnp.exp(-(hd @ wo + bo)))
    x_ref = x.at[:, mut_idx].set(recon_ref)

    np.testing.assert_allclose(np.asarray(mu_z), np.asarray(mu_ref),
                               rtol=1e-5, atol=1e-5)
    np.testing.assert_allclose(np.asarray(log_var_z), np.asarray(lv_ref),
                               rtol=1e-5, atol=1e-5)
    np.testing.assert_allclose(np.asarray(x_out), np.asarray(x_ref),
                               rtol=1e-5, atol=1e-5)

    print("KERNEL_OK")
</pallas_src>

<mosaic_0001>
module attributes {stable_mosaic.version = 11 : i64} {
  func.func @_vae_kernel(%arg0: i32, %arg1: memref<152x24xf32, #tpu.memory_space<vmem>>, %arg2: memref<152x8xf32, #tpu.memory_space<vmem>>, %arg3: memref<1x24xf32, #tpu.memory_space<vmem>>, %arg4: memref<24x32xf32, #tpu.memory_space<vmem>>, %arg5: memref<1x32xf32, #tpu.memory_space<vmem>>, %arg6: memref<32x16xf32, #tpu.memory_space<vmem>>, %arg7: memref<1x16xf32, #tpu.memory_space<vmem>>, %arg8: memref<8x32xf32, #tpu.memory_space<vmem>>, %arg9: memref<24x32xf32, #tpu.memory_space<vmem>>, %arg10: memref<1x32xf32, #tpu.memory_space<vmem>>, %arg11: memref<32x24xf32, #tpu.memory_space<vmem>>, %arg12: memref<1x24xf32, #tpu.memory_space<vmem>>, %arg13: memref<152x128xf32, #tpu.memory_space<vmem>>) attributes {dimension_semantics = [#tpu.dimension_semantics<parallel>], iteration_bounds = array<i64: 2>, scalar_prefetch = 0 : i64, scratch_operands = 0 : i64, tpu.core_type = #tpu.core_type<tc>, window_params = [{transform_indices = @transform_0, window_bounds = array<i64: 152, 24>}, {transform_indices = @transform_1, window_bounds = array<i64: 152, 8>}, {pipeline_mode = #tpu.pipeline_mode<synchronous>, transform_indices = @transform_2, window_bounds = array<i64: 1, 24>}, {pipeline_mode = #tpu.pipeline_mode<synchronous>, transform_indices = @transform_3, window_bounds = array<i64: 24, 32>}, {pipeline_mode = #tpu.pipeline_mode<synchronous>, transform_indices = @transform_4, window_bounds = array<i64: 1, 32>}, {pipeline_mode = #tpu.pipeline_mode<synchronous>, transform_indices = @transform_5, window_bounds = array<i64: 32, 16>}, {pipeline_mode = #tpu.pipeline_mode<synchronous>, transform_indices = @transform_6, window_bounds = array<i64: 1, 16>}, {pipeline_mode = #tpu.pipeline_mode<synchronous>, transform_indices = @transform_7, window_bounds = array<i64: 8, 32>}, {pipeline_mode = #tpu.pipeline_mode<synchronous>, transform_indices = @transform_8, window_bounds = array<i64: 24, 32>}, {pipeline_mode = #tpu.pipeline_mode<synchronous>, transform_indices = @transform_9, window_bounds = array<i64: 1, 32>}, {pipeline_mode = #tpu.pipeline_mode<synchronous>, transform_indices = @transform_10, window_bounds = array<i64: 32, 24>}, {pipeline_mode = #tpu.pipeline_mode<synchronous>, transform_indices = @transform_11, window_bounds = array<i64: 1, 24>}, {transform_indices = @transform_12, window_bounds = array<i64: 152, 128>}]} {
    %c0 = arith.constant 0 : index
    %c0_0 = arith.constant 0 : index
    %0 = vector.load %arg1[%c0, %c0_0] : memref<152x24xf32, #tpu.memory_space<vmem>>, vector<152x24xf32>
    %c0_1 = arith.constant 0 : index
    %c0_2 = arith.constant 0 : index
    %1 = vector.load %arg4[%c0_1, %c0_2] : memref<24x32xf32, #tpu.memory_space<vmem>>, vector<24x32xf32>
    %cst = arith.constant dense<0.000000e+00> : vector<152x32xf32>
    %2 = tpu.matmul %0, %1, %cst {dimension_numbers = #tpu.dot_dimension_numbers<[1], [0], [0], [1], [0, 0, 1, 1], [], []>} : vector<152x24xf32>, vector<24x32xf32>, vector<152x32xf32> -> vector<152x32xf32>
    %c0_3 = arith.constant 0 : index
    %c0_4 = arith.constant 0 : index
    %3 = vector.load %arg5[%c0_3, %c0_4] : memref<1x32xf32, #tpu.memory_space<vmem>>, vector<1x32xf32>
    %4 = vector.broadcast %3 : vector<1x32xf32> to vector<152x32xf32>
    %5 = arith.addf %2, %4 : vector<152x32xf32>
    %cst_5 = arith.constant 0.000000e+00 : f32
    %6 = vector.broadcast %cst_5 : f32 to vector<152x32xf32>
    %7 = arith.maximumf %5, %6 : vector<152x32xf32>
    %c0_6 = arith.constant 0 : index
    %c0_7 = arith.constant 0 : index
    %8 = vector.load %arg6[%c0_6, %c0_7] : memref<32x16xf32, #tpu.memory_space<vmem>>, vector<32x16xf32>
    %cst_8 = arith.constant dense<0.000000e+00> : vector<152x16xf32>
    %9 = tpu.matmul %7, %8, %cst_8 {dimension_numbers = #tpu.dot_dimension_numbers<[1], [0], [0], [1], [0, 0, 1, 1], [], []>} : vector<152x32xf32>, vector<32x16xf32>, vector<152x16xf32> -> vector<152x16xf32>
    %c0_9 = arith.constant 0 : index
    %c0_10 = arith.constant 0 : index
    %10 = vector.load %arg7[%c0_9, %c0_10] : memref<1x16xf32, #tpu.memory_space<vmem>>, vector<1x16xf32>
    %11 = vector.broadcast %10 : vector<1x16xf32> to vector<152x16xf32>
    %12 = arith.addf %9, %11 : vector<152x16xf32>
    %13 = vector.extract_strided_slice %12 {offsets = [0, 0], sizes = [152, 8], strides = [1, 1]} : vector<152x16xf32> to vector<152x8xf32>
    %14 = vector.extract_strided_slice %12 {offsets = [0, 8], sizes = [152, 8], strides = [1, 1]} : vector<152x16xf32> to vector<152x8xf32>
    %cst_11 = arith.constant 5.000000e-01 : f32
    %15 = vector.broadcast %cst_11 : f32 to vector<152x8xf32>
    %16 = arith.mulf %15, %13 : vector<152x8xf32>
    %17 = math.exp %16 : vector<152x8xf32>
    %c0_12 = arith.constant 0 : index
    %c0_13 = arith.constant 0 : index
    %18 = vector.load %arg2[%c0_12, %c0_13] : memref<152x8xf32, #tpu.memory_space<vmem>>, vector<152x8xf32>
    %19 = arith.mulf %17, %18 : vector<152x8xf32>
    %20 = arith.addf %14, %19 : vector<152x8xf32>
    %c0_14 = arith.constant 0 : index
    %c0_15 = arith.constant 0 : index
    %21 = vector.load %arg8[%c0_14, %c0_15] : memref<8x32xf32, #tpu.memory_space<vmem>>, vector<8x32xf32>
    %cst_16 = arith.constant dense<0.000000e+00> : vector<152x32xf32>
    %22 = tpu.matmul %20, %21, %cst_16 {dimension_numbers = #tpu.dot_dimension_numbers<[1], [0], [0], [1], [0, 0, 1, 1], [], []>} : vector<152x8xf32>, vector<8x32xf32>, vector<152x32xf32> -> vector<152x32xf32>
    %c0_17 = arith.constant 0 : index
    %c0_18 = arith.constant 0 : index
    %23 = vector.load %arg9[%c0_17, %c0_18] : memref<24x32xf32, #tpu.memory_space<vmem>>, vector<24x32xf32>
    %cst_19 = arith.constant dense<0.000000e+00> : vector<152x32xf32>
    %24 = tpu.matmul %0, %23, %cst_19 {dimension_numbers = #tpu.dot_dimension_numbers<[1], [0], [0], [1], [0, 0, 1, 1], [], []>} : vector<152x24xf32>, vector<24x32xf32>, vector<152x32xf32> -> vector<152x32xf32>
    %25 = arith.addf %22, %24 : vector<152x32xf32>
    %c0_20 = arith.constant 0 : index
    %c0_21 = arith.constant 0 : index
    %26 = vector.load %arg10[%c0_20, %c0_21] : memref<1x32xf32, #tpu.memory_space<vmem>>, vector<1x32xf32>
    %27 = vector.broadcast %26 : vector<1x32xf32> to vector<152x32xf32>
    %28 = arith.addf %25, %27 : vector<152x32xf32>
    %cst_22 = arith.constant 0.000000e+00 : f32
    %29 = vector.broadcast %cst_22 : f32 to vector<152x32xf32>
    %30 = arith.maximumf %28, %29 : vector<152x32xf32>
    %c0_23 = arith.constant 0 : index
    %c0_24 = arith.constant 0 : index
    %31 = vector.load %arg11[%c0_23, %c0_24] : memref<32x24xf32, #tpu.memory_space<vmem>>, vector<32x24xf32>
    %cst_25 = arith.constant dense<0.000000e+00> : vector<152x24xf32>
    %32 = tpu.matmul %30, %31, %cst_25 {dimension_numbers = #tpu.dot_dimension_numbers<[1], [0], [0], [1], [0, 0, 1, 1], [], []>} : vector<152x32xf32>, vector<32x24xf32>, vector<152x24xf32> -> vector<152x24xf32>
    %c0_26 = arith.constant 0 : index
    %c0_27 = arith.constant 0 : index
    %33 = vector.load %arg12[%c0_26, %c0_27] : memref<1x24xf32, #tpu.memory_space<vmem>>, vector<1x24xf32>
    %34 = vector.broadcast %33 : vector<1x24xf32> to vector<152x24xf32>
    %35 = arith.addf %32, %34 : vector<152x24xf32>
    %cst_28 = arith.constant 0.000000e+00 : f32
    %36 = vector.broadcast %cst_28 : f32 to vector<152x24xf32>
    %37 = arith.subf %36, %35 : vector<152x24xf32>
    %38 = math.exp %37 : vector<152x24xf32>
    %cst_29 = arith.constant 1.000000e+00 : f32
    %39 = vector.broadcast %cst_29 : f32 to vector<152x24xf32>
    %40 = arith.addf %39, %38 : vector<152x24xf32>
    %cst_30 = arith.constant 1.000000e+00 : f32
    %41 = vector.broadcast %cst_30 : f32 to vector<152x24xf32>
    %42 = arith.divf %41, %40 : vector<152x24xf32>
    %c0_31 = arith.constant 0 : index
    %c0_32 = arith.constant 0 : index
    %43 = vector.load %arg3[%c0_31, %c0_32] : memref<1x24xf32, #tpu.memory_space<vmem>>, vector<1x24xf32>
    %44 = vector.broadcast %43 : vector<1x24xf32> to vector<152x24xf32>
    %45 = arith.mulf %44, %42 : vector<152x24xf32>
    %cst_33 = arith.constant 1.000000e+00 : f32
    %46 = vector.broadcast %cst_33 : f32 to vector<1x24xf32>
    %47 = arith.subf %46, %43 : vector<1x24xf32>
    %48 = vector.broadcast %47 : vector<1x24xf32> to vector<152x24xf32>
    %49 = arith.mulf %48, %0 : vector<152x24xf32>
    %50 = arith.addf %45, %49 : vector<152x24xf32>
    %c0_34 = arith.constant 0 : index
    %c0_35 = arith.constant 0 : index
    %51 = vector.load %arg13[%c0_34, %c0_35] : memref<152x128xf32, #tpu.memory_space<vmem>>, vector<152x24xf32>
    tpu.vector_store %arg13[%c0_34, %c0_35], %50 {strides = array<i32>} : memref<152x128xf32, #tpu.memory_space<vmem>>, vector<152x24xf32>,
    %c0_36 = arith.constant 0 : index
    %c24 = arith.constant 24 : index
    %52 = vector.load %arg13[%c0_36, %c24] : memref<152x128xf32, #tpu.memory_space<vmem>>, vector<152x8xf32>
    tpu.vector_store %arg13[%c0_36, %c24], %14 {strides = array<i32>} : memref<152x128xf32, #tpu.memory_space<vmem>>, vector<152x8xf32>,
    %c0_37 = arith.constant 0 : index
    %c32 = arith.constant 32 : index
    %53 = vector.load %arg13[%c0_37, %c32] : memref<152x128xf32, #tpu.memory_space<vmem>>, vector<152x8xf32>
    tpu.vector_store %arg13[%c0_37, %c32], %13 {strides = array<i32>} : memref<152x128xf32, #tpu.memory_space<vmem>>, vector<152x8xf32>,
    return
  }
  func.func @transform_0(%arg0: i32) -> (i32, i32) {
    %c0_i32 = arith.constant 0 : i32
    %c0_i32_0 = arith.constant 0 : i32
    return %arg0, %c0_i32 : i32, i32
  }
  func.func @transform_1(%arg0: i32) -> (i32, i32) {
    %c0_i32 = arith.constant 0 : i32
    %c0_i32_0 = arith.constant 0 : i32
    return %arg0, %c0_i32 : i32, i32
  }
  func.func @transform_2(%arg0: i32) -> (i32, i32) {
    %c0_i32 = arith.constant 0 : i32
    %c0_i32_0 = arith.constant 0 : i32
    %c0_i32_1 = arith.constant 0 : i32
    return %c0_i32, %c0_i32_0 : i32, i32
  }
  func.func @transform_3(%arg0: i32) -> (i32, i32) {
    %c0_i32 = arith.constant 0 : i32
    %c0_i32_0 = arith.constant 0 : i32
    %c0_i32_1 = arith.constant 0 : i32
    return %c0_i32, %c0_i32_0 : i32, i32
  }
  func.func @transform_4(%arg0: i32) -> (i32, i32) {
    %c0_i32 = arith.constant 0 : i32
    %c0_i32_0 = arith.constant 0 : i32
    %c0_i32_1 = arith.constant 0 : i32
    return %c0_i32, %c0_i32_0 : i32, i32
  }
  func.func @transform_5(%arg0: i32) -> (i32, i32) {
    %c0_i32 = arith.constant 0 : i32
    %c0_i32_0 = arith.constant 0 : i32
    %c0_i32_1 = arith.constant 0 : i32
    return %c0_i32, %c0_i32_0 : i32, i32
  }
  func.func @transform_6(%arg0: i32) -> (i32, i32) {
    %c0_i32 = arith.constant 0 : i32
    %c0_i32_0 = arith.constant 0 : i32
    %c0_i32_1 = arith.constant 0 : i32
    return %c0_i32, %c0_i32_0 : i32, i32
  }
  func.func @transform_7(%arg0: i32) -> (i32, i32) {
    %c0_i32 = arith.constant 0 : i32
    %c0_i32_0 = arith.constant 0 : i32
    %c0_i32_1 = arith.constant 0 : i32
    return %c0_i32, %c0_i32_0 : i32, i32
  }
  func.func @transform_8(%arg0: i32) -> (i32, i32) {
    %c0_i32 = arith.constant 0 : i32
    %c0_i32_0 = arith.constant 0 : i32
    %c0_i32_1 = arith.constant 0 : i32
    return %c0_i32, %c0_i32_0 : i32, i32
  }
  func.func @transform_9(%arg0: i32) -> (i32, i32) {
    %c0_i32 = arith.constant 0 : i32
    %c0_i32_0 = arith.constant 0 : i32
    %c0_i32_1 = arith.constant 0 : i32
    return %c0_i32, %c0_i32_0 : i32, i32
  }
  func.func @transform_10(%arg0: i32) -> (i32, i32) {
    %c0_i32 = arith.constant 0 : i32
    %c0_i32_0 = arith.constant 0 : i32
    %c0_i32_1 = arith.constant 0 : i32
    return %c0_i32, %c0_i32_0 : i32, i32
  }
  func.func @transform_11(%arg0: i32) -> (i32, i32) {
    %c0_i32 = arith.constant 0 : i32
    %c0_i32_0 = arith.constant 0 : i32
    %c0_i32_1 = arith.constant 0 : i32
    return %c0_i32, %c0_i32_0 : i32, i32
  }
  func.func @transform_12(%arg0: i32) -> (i32, i32) {
    %c0_i32 = arith.constant 0 : i32
    %c0_i32_0 = arith.constant 0 : i32
    return %arg0, %c0_i32 : i32, i32
  }
}

</mosaic_0001>

<llo_original>
// kernel: vae_forward.1
$region0: #{vae_forward.1}
  #allocation0 [shape = 'u32[]', space=smem, size = 0x4, offset = 0x4, fixed_abs, tag = 'smem constant byte address 0x4 - core index']
  #allocation1 [shape = 'u32[144,128]{1,0:T(1,128)}', space=vmem, size = 0x12000, scoped, tag = 'internal scratch']
  %s0 = inlined_call_operand.vmem [shape: f32[304,24], index: 0, kind: input, shape index: {}]
  %s1 = inlined_call_operand.vmem [shape: f32[304,8], index: 1, kind: input, shape index: {}]
  %s2 = inlined_call_operand.vmem [shape: f32[1,24], index: 2, kind: input, shape index: {}]
  %s3 = inlined_call_operand.vmem [shape: f32[24,32], index: 3, kind: input, shape index: {}]
  %s4 = inlined_call_operand.vmem [shape: f32[1,32], index: 4, kind: input, shape index: {}]
  %s5 = inlined_call_operand.vmem [shape: f32[32,16], index: 5, kind: input, shape index: {}]
  %s6 = inlined_call_operand.vmem [shape: f32[1,16], index: 6, kind: input, shape index: {}]
  %s7 = inlined_call_operand.vmem [shape: f32[8,32], index: 7, kind: input, shape index: {}]
  %s8 = inlined_call_operand.vmem [shape: f32[24,32], index: 8, kind: input, shape index: {}]
  %s9 = inlined_call_operand.vmem [shape: f32[1,32], index: 9, kind: input, shape index: {}]
  %s10 = inlined_call_operand.vmem [shape: f32[32,24], index: 10, kind: input, shape index: {}]
  %s11 = inlined_call_operand.vmem [shape: f32[1,24], index: 11, kind: input, shape index: {}]
  %s12 = inlined_call_operand.vmem [shape: f32[304,128], index: 12, kind: output, shape index: {}]
  %s13 = sld [smem:[#allocation0]]
  $region81: #{vae_forward.1} parent=0
    _
  %s15 = ssub.s32 1, %s13
  %s16 = scalar_select 0, %s15, %s13
  loop: start=0, step=1, limit=4
  $region2: #{vae_forward.1} parent=0 // loop_pre_header
    _
  $region3: #{vae_forward.1} parent=0 // loop_header
    %s18 = sphi 0, %s22
    %p19 = scmp.ge.s32.totalorder %s18, 4
    %s28 = sphi 0, %s30
    %s31 = sphi 0, %s28
    %s32 = sphi 0, %s31
    %s48 = sphi 0, %s32
    %s54 = sphi 0, %s56
    %s57 = sphi 0, %s54
    %s58 = sphi 0, %s57
    %s74 = sphi 0, %s58
    %s78 = sphi 0, %s78
    %s80 = sphi 0, %s78
    %s81 = sphi 0, %s80
    %s95 = sphi 0, %s81
    %s99 = sphi 0, %s99
    %s101 = sphi 0, %s99
    %s102 = sphi 0, %s101
    %s116 = sphi 0, %s102
    %s120 = sphi 0, %s120
    %s122 = sphi 0, %s120
    %s123 = sphi 0, %s122
    %s137 = sphi 0, %s123
    %s141 = sphi 0, %s141
    %s143 = sphi 0, %s141
    %s144 = sphi 0, %s143
    %s158 = sphi 0, %s144
    %s162 = sphi 0, %s162
    %s164 = sphi 0, %s162
    %s165 = sphi 0, %s164
    %s179 = sphi 0, %s165
    %s183 = sphi 0, %s183
    %s185 = sphi 0, %s183
    %s186 = sphi 0, %s185
    %s200 = sphi 0, %s186
    %s204 = sphi 0, %s204
    %s206 = sphi 0, %s204
    %s207 = sphi 0, %s206
    %s221 = sphi 0, %s207
    %s225 = sphi 0, %s225
    %s227 = sphi 0, %s225
    %s228 = sphi 0, %s227
    %s242 = sphi 0, %s228
    %s246 = sphi 0, %s246
    %s248 = sphi 0, %s246
    %s249 = sphi 0, %s248
    %s263 = sphi 0, %s249
    %s267 = sphi 0, %s267
    %s269 = sphi 0, %s267
    %s270 = sphi 0, %s269
    %s284 = sphi 0, %s270
    %s290 = sphi 0, %s292
    %s293 = sphi 0, %s290
    %s294 = sphi 0, %s293
    %s310 = sphi 0, %s294
  $region4: #{vae_forward.1} parent=0 // loop_header_branch
    %21 = sbr.rel (%p19) target = $region8
  $region5: #{vae_forward.1} parent=0 // loop_body
    %s23 = ssub.s32 %s18, 1
    %s24 = ssub.s32 %s18, 2
    %s25 = sadd.s32 %s18, 1
    %s26 = ssub.s32 %s18, %s25
    %p27 = scmp.eq.s32.totalorder %s26, 0
    %s29 = sadd.s32 %s28, 1
    %s30 = scalar_select %p27, %s28, %s29
    %p33 = pneg %p27
    %p34 = scmp.eq.s32.totalorder %s18, 1
    %p35 = por %p33, %p34
    %p36 = scmp.ne.s32.totalorder %s28, %s31
    %p37 = scmp.eq.s32.totalorder %s18, 0
    %p38 = por %p36, %p37
    %p39 = scmp.ne.s32.totalorder %s28, %s31
    %p40 = scmp.eq.s32.totalorder %s23, 1
    %p41 = por %p39, %p40
    %p42 = scmp.ne.s32.totalorder %s31, %s32
    %p43 = scmp.eq.s32.totalorder %s23, 0
    %p44 = por %p42, %p43
    %p45 = scmp.ne.s32.totalorder %s31, %s32
    %p46 = scmp.eq.s32.totalorder %s24, 1
    %p47 = por %p45, %p46
    %p49 = scmp.ne.s32.totalorder %s32, %s48
    %p50 = scmp.eq.s32.totalorder %s24, 0
    %p51 = por %p49, %p50
    %s52 = ssub.s32 %s18, %s25
    %p53 = scmp.eq.s32.totalorder %s52, 0
    %s55 = sadd.s32 %s54, 1
    %s56 = scalar_select %p53, %s54, %s55
    %p59 = pneg %p53
    %p60 = scmp.eq.s32.totalorder %s18, 1
    %p61 = por %p59, %p60
    %p62 = scmp.ne.s32.totalorder %s54, %s57
    %p63 = scmp.eq.s32.totalorder %s18, 0
    %p64 = por %p62, %p63
    %p65 = scmp.ne.s32.totalorder %s54, %s57
    %p66 = scmp.eq.s32.totalorder %s23, 1
    %p67 = por %p65, %p66
    %p68 = scmp.ne.s32.totalorder %s57, %s58
    %p69 = scmp.eq.s32.totalorder %s23, 0
    %p70 = por %p68, %p69
    %p71 = scmp.ne.s32.totalorder %s57, %s58
    %p72 = scmp.eq.s32.totalorder %s24, 1
    %p73 = por %p71, %p72
    %p75 = scmp.ne.s32.totalorder %s58, %s74
    %p76 = scmp.eq.s32.totalorder %s24, 0
    %p77 = por %p75, %p76
    %s79 = sadd.s32 %s78, 1
    %p82 = scmp.eq.s32.totalorder %s18, 1
    %p83 = scmp.ne.s32.totalorder %s78, %s80
    %p84 = scmp.eq.s32.totalorder %s18, 0
    %p85 = por %p83, %p84
    %p86 = scmp.ne.s32.totalorder %s78, %s80
    %p87 = scmp.eq.s32.totalorder %s23, 1
    %p88 = por %p86, %p87
    %p89 = scmp.ne.s32.totalorder %s80, %s81
    %p90 = scmp.eq.s32.totalorder %s23, 0
    %p91 = por %p89, %p90
    %p92 = scmp.ne.s32.totalorder %s80, %s81
    %p93 = scmp.eq.s32.totalorder %s24, 1
    %p94 = por %p92, %p93
    %p96 = scmp.ne.s32.totalorder %s81, %s95
    %p97 = scmp.eq.s32.totalorder %s24, 0
    %p98 = por %p96, %p97
    %s100 = sadd.s32 %s99, 1
    %p103 = scmp.eq.s32.totalorder %s18, 1
    %p104 = scmp.ne.s32.totalorder %s99, %s101
    %p105 = scmp.eq.s32.totalorder %s18, 0
    %p106 = por %p104, %p105
    %p107 = scmp.ne.s32.totalorder %s99, %s101
    %p108 = scmp.eq.s32.totalorder %s23, 1
    %p109 = por %p107, %p108
    %p110 = scmp.ne.s32.totalorder %s101, %s102
    %p111 = scmp.eq.s32.totalorder %s23, 0
    %p112 = por %p110, %p111
    %p113 = scmp.ne.s32.totalorder %s101, %s102
    %p114 = scmp.eq.s32.totalorder %s24, 1
    %p115 = por %p113, %p114
    %p117 = scmp.ne.s32.totalorder %s102, %s116
    %p118 = scmp.eq.s32.totalorder %s24, 0
    %p119 = por %p117, %p118
    %s121 = sadd.s32 %s120, 1
    %p124 = scmp.eq.s32.totalorder %s18, 1
    %p125 = scmp.ne.s32.totalorder %s120, %s122
    %p126 = scmp.eq.s32.totalorder %s18, 0
    %p127 = por %p125, %p126
    %p128 = scmp.ne.s32.totalorder %s120, %s122
    %p129 = scmp.eq.s32.totalorder %s23, 1
    %p130 = por %p128, %p129
    %p131 = scmp.ne.s32.totalorder %s122, %s123
    %p132 = scmp.eq.s32.totalorder %s23, 0
    %p133 = por %p131, %p132
    %p134 = scmp.ne.s32.totalorder %s122, %s123
    %p135 = scmp.eq.s32.totalorder %s24, 1
    %p136 = por %p134, %p135
    %p138 = scmp.ne.s32.totalorder %s123, %s137
    %p139 = scmp.eq.s32.totalorder %s24, 0
    %p140 = por %p138, %p139
    %s142 = sadd.s32 %s141, 1
    %p145 = scmp.eq.s32.totalorder %s18, 1
    %p146 = scmp.ne.s32.totalorder %s141, %s143
    %p147 = scmp.eq.s32.totalorder %s18, 0
    %p148 = por %p146, %p147
    %p149 = scmp.ne.s32.totalorder %s141, %s143
    %p150 = scmp.eq.s32.totalorder %s23, 1
    %p151 = por %p149, %p150
    %p152 = scmp.ne.s32.totalorder %s143, %s144
    %p153 = scmp.eq.s32.totalorder %s23, 0
    %p154 = por %p152, %p153
    %p155 = scmp.ne.s32.totalorder %s143, %s144
    %p156 = scmp.eq.s32.totalorder %s24, 1
    %p157 = por %p155, %p156
    %p159 = scmp.ne.s32.totalorder %s144, %s158
    %p160 = scmp.eq.s32.totalorder %s24, 0
    %p161 = por %p159, %p160
    %s163 = sadd.s32 %s162, 1
    %p166 = scmp.eq.s32.totalorder %s18, 1
    %p167 = scmp.ne.s32.totalorder %s162, %s164
    %p168 = scmp.eq.s32.totalorder %s18, 0
    %p169 = por %p167, %p168
    %p170 = scmp.ne.s32.totalorder %s162, %s164
    %p171 = scmp.eq.s32.totalorder %s23, 1
    %p172 = por %p170, %p171
    %p173 = scmp.ne.s32.totalorder %s164, %s165
    %p174 = scmp.eq.s32.totalorder %s23, 0
    %p175 = por %p173, %p174
    %p176 = scmp.ne.s32.totalorder %s164, %s165
    %p177 = scmp.eq.s32.totalorder %s24, 1
    %p178 = por %p176, %p177
    %p180 = scmp.ne.s32.totalorder %s165, %s179
    %p181 = scmp.eq.s32.totalorder %s24, 0
    %p182 = por %p180, %p181
    %s184 = sadd.s32 %s183, 1
    %p187 = scmp.eq.s32.totalorder %s18, 1
    %p188 = scmp.ne.s32.totalorder %s183, %s185
    %p189 = scmp.eq.s32.totalorder %s18, 0
    %p190 = por %p188, %p189
    %p191 = scmp.ne.s32.totalorder %s183, %s185
    %p192 = scmp.eq.s32.totalorder %s23, 1
    %p193 = por %p191, %p192
    %p194 = scmp.ne.s32.totalorder %s185, %s186
    %p195 = scmp.eq.s32.totalorder %s23, 0
    %p196 = por %p194, %p195
    %p197 = scmp.ne.s32.totalorder %s185, %s186
    %p198 = scmp.eq.s32.totalorder %s24, 1
    %p199 = por %p197, %p198
    %p201 = scmp.ne.s32.totalorder %s186, %s200
    %p202 = scmp.eq.s32.totalorder %s24, 0
    %p203 = por %p201, %p202
    %s205 = sadd.s32 %s204, 1
    %p208 = scmp.eq.s32.totalorder %s18, 1
    %p209 = scmp.ne.s32.totalorder %s204, %s206
    %p210 = scmp.eq.s32.totalorder %s18, 0
    %p211 = por %p209, %p210
    %p212 = scmp.ne.s32.totalorder %s204, %s206
    %p213 = scmp.eq.s32.totalorder %s23, 1
    %p214 = por %p212, %p213
    %p215 = scmp.ne.s32.totalorder %s206, %s207
    %p216 = scmp.eq.s32.totalorder %s23, 0
    %p217 = por %p215, %p216
    %p218 = scmp.ne.s32.totalorder %s206, %s207
    %p219 = scmp.eq.s32.totalorder %s24, 1
    %p220 = por %p218, %p219
    %p222 = scmp.ne.s32.totalorder %s207, %s221
    %p223 = scmp.eq.s32.totalorder %s24, 0
    %p224 = por %p222, %p223
    %s226 = sadd.s32 %s225, 1
    %p229 = scmp.eq.s32.totalorder %s18, 1
    %p230 = scmp.ne.s32.totalorder %s225, %s227
    %p231 = scmp.eq.s32.totalorder %s18, 0
    %p232 = por %p230, %p231
    %p233 = scmp.ne.s32.totalorder %s225, %s227
    %p234 = scmp.eq.s32.totalorder %s23, 1
    %p235 = por %p233, %p234
    %p236 = scmp.ne.s32.totalorder %s227, %s228
    %p237 = scmp.eq.s32.totalorder %s23, 0
    %p238 = por %p236, %p237
    %p239 = scmp.ne.s32.totalorder %s227, %s228
    %p240 = scmp.eq.s32.totalorder %s24, 1
    %p241 = por %p239, %p240
    %p243 = scmp.ne.s32.totalorder %s228, %s242
    %p244 = scmp.eq.s32.totalorder %s24, 0
    %p245 = por %p243, %p244
    %s247 = sadd.s32 %s246, 1
    %p250 = scmp.eq.s32.totalorder %s18, 1
    %p251 = scmp.ne.s32.totalorder %s246, %s248
    %p252 = scmp.eq.s32.totalorder %s18, 0
    %p253 = por %p251, %p252
    %p254 = scmp.ne.s32.totalorder %s246, %s248
    %p255 = scmp.eq.s32.totalorder %s23, 1
    %p256 = por %p254, %p255
    %p257 = scmp.ne.s32.totalorder %s248, %s249
    %p258 = scmp.eq.s32.totalorder %s23, 0
    %p259 = por %p257, %p258
    %p260 = scmp.ne.s32.totalorder %s248, %s249
    %p261 = scmp.eq.s32.totalorder %s24, 1
    %p262 = por %p260, %p261
    %p264 = scmp.ne.s32.totalorder %s249, %s263
    %p265 = scmp.eq.s32.totalorder %s24, 0
    %p266 = por %p264, %p265
    %s268 = sadd.s32 %s267, 1
    %p271 = scmp.eq.s32.totalorder %s18, 1
    %p272 = scmp.ne.s32.totalorder %s267, %s269
    %p273 = scmp.eq.s32.totalorder %s18, 0
    %p274 = por %p272, %p273
    %p275 = scmp.ne.s32.totalorder %s267, %s269
    %p276 = scmp.eq.s32.totalorder %s23, 1
    %p277 = por %p275, %p276
    %p278 = scmp.ne.s32.totalorder %s269, %s270
    %p279 = scmp.eq.s32.totalorder %s23, 0
    %p280 = por %p278, %p279
    %p281 = scmp.ne.s32.totalorder %s269, %s270
    %p282 = scmp.eq.s32.totalorder %s24, 1
    %p283 = por %p281, %p282
    %p285 = scmp.ne.s32.totalorder %s270, %s284
    %p286 = scmp.eq.s32.totalorder %s24, 0
    %p287 = por %p285, %p286
    %s288 = ssub.s32 %s18, %s25
    %p289 = scmp.eq.s32.totalorder %s288, 0
    %s291 = sadd.s32 %s290, 1
    %s292 = scalar_select %p289, %s290, %s291
    %p295 = pneg %p289
    %p296 = scmp.eq.s32.totalorder %s18, 1
    %p297 = por %p295, %p296
    %p298 = scmp.ne.s32.totalorder %s290, %s293
    %p299 = scmp.eq.s32.totalorder %s18, 0
    %p300 = por %p298, %p299
    %p301 = scmp.ne.s32.totalorder %s290, %s293
    %p302 = scmp.eq.s32.totalorder %s23, 1
    %p303 = por %p301, %p302
    %p304 = scmp.ne.s32.totalorder %s293, %s294
    %p305 = scmp.eq.s32.totalorder %s23, 0
    %p306 = por %p304, %p305
    %p307 = scmp.ne.s32.totalorder %s293, %s294
    %p308 = scmp.eq.s32.totalorder %s24, 1
    %p309 = por %p307, %p308
    %p311 = scmp.ne.s32.totalorder %s294, %s310
    %p312 = scmp.eq.s32.totalorder %s24, 0
    %p313 = por %p311, %p312
    %p314 = scmp.le.s32.totalorder 1, %s18
    %p315 = scmp.lt.s32.totalorder %s18, 3
    %p316 = pnand %p314, %p315
    %p317 = pneg %p316
    // Predicated region
    $region9: #{vae_forward.1} parent=5 // pred_check
      _
    $region10: #{vae_forward.1} parent=5 // pred_check_branch
      %319 = sbr.rel (%p316) target = $region12
    $region11: #{vae_forward.1} parent=5 // pred_region
      %s320 = ssub.s32 %s18, 1
      // Predicated region
      $region13: #{vae_forward.1} parent=11 // pred_check
        %p321 = pneg %p91
      $region14: #{vae_forward.1} parent=11 // pred_check_branch
        %323 = sbr.rel (%p321) target = $region16
      $region15: #{vae_forward.1} parent=11 // pred_region
        _
      $region16: #{vae_forward.1} parent=11 // pred_fallthru
        _
      // Predicated region
      $region17: #{vae_forward.1} parent=11 // pred_check
        %p324 = pneg %p112
      $region18: #{vae_forward.1} parent=11 // pred_check_branch
        %326 = sbr.rel (%p324) target = $region20
      $region19: #{vae_forward.1} parent=11 // pred_region
        _
      $region20: #{vae_forward.1} parent=11 // pred_fallthru
        _
      // Predicated region
      $region21: #{vae_forward.1} parent=11 // pred_check
        %p327 = pneg %p133
      $region22: #{vae_forward.1} parent=11 // pred_check_branch
        %329 = sbr.rel (%p327) target = $region24
      $region23: #{vae_forward.1} parent=11 // pred_region
        _
      $region24: #{vae_forward.1} parent=11 // pred_fallthru
        _
      // Predicated region
      $region25: #{vae_forward.1} parent=11 // pred_check
        %p330 = pneg %p154
      $region26: #{vae_forward.1} parent=11 // pred_check_branch
        %332 = sbr.rel (%p330) target = $region28
      $region27: #{vae_forward.1} parent=11 // pred_region
        _
      $region28: #{vae_forward.1} parent=11 // pred_fallthru
        _
      // Predicated region
      $region29: #{vae_forward.1} parent=11 // pred_check
        %p333 = pneg %p175
      $region30: #{vae_forward.1} parent=11 // pred_check_branch
        %335 = sbr.rel (%p333) target = $region32
      $region31: #{vae_forward.1} parent=11 // pred_region
        _
      $region32: #{vae_forward.1} parent=11 // pred_fallthru
        _
      // Predicated region
      $region33: #{vae_forward.1} parent=11 // pred_check
        %p336 = pneg %p196
      $region34: #{vae_forward.1} parent=11 // pred_check_branch
        %338 = sbr.rel (%p336) target = $region36
      $region35: #{vae_forward.1} parent=11 // pred_region
        _
      $region36: #{vae_forward.1} parent=11 // pred_fallthru
        _
      // Predicated region
      $region37: #{vae_forward.1} parent=11 // pred_check
        %p339 = pneg %p217
      $region38: #{vae_forward.1} parent=11 // pred_check_branch
        %341 = sbr.rel (%p339) target = $region40
      $region39: #{vae_forward.1} parent=11 // pred_region
        _
      $region40: #{vae_forward.1} parent=11 // pred_fallthru
        _
      // Predicated region
      $region41: #{vae_forward.1} parent=11 // pred_check
        %p342 = pneg %p238
      $region42: #{vae_forward.1} parent=11 // pred_check_branch
        %344 = sbr.rel (%p342) target = $region44
      $region43: #{vae_forward.1} parent=11 // pred_region
        _
      $region44: #{vae_forward.1} parent=11 // pred_fallthru
        _
      // Predicated region
      $region45: #{vae_forward.1} parent=11 // pred_check
        %p345 = pneg %p259
      $region46: #{vae_forward.1} parent=11 // pred_check_branch
        %347 = sbr.rel (%p345) target = $region48
      $region47: #{vae_forward.1} parent=11 // pred_region
        _
      $region48: #{vae_forward.1} parent=11 // pred_fallthru
        _
      // Predicated region
      $region49: #{vae_forward.1} parent=11 // pred_check
        %p348 = pneg %p280
      $region50: #{vae_forward.1} parent=11 // pred_check_branch
        %350 = sbr.rel (%p348) target = $region52
      $region51: #{vae_forward.1} parent=11 // pred_region
        _
      $region52: #{vae_forward.1} parent=11 // pred_fallthru
        _
    $region12: #{vae_forward.1} parent=5 // pred_fallthru
      _
    %p351 = scmp.lt.s32.totalorder %s18, 2
    // Predicated region
    $region53: #{vae_forward.1} parent=5 // pred_check
      %p352 = pneg %p351
    $region54: #{vae_forward.1} parent=5 // pred_check_branch
      %354 = sbr.rel (%p352) target = $region56
    $region55: #{vae_forward.1} parent=5 // pred_region
      // Predicated region
      $region57: #{vae_forward.1} parent=55 // pred_check
        %p355 = pneg %p38
      $region58: #{vae_forward.1} parent=55 // pred_check_branch
        %357 = sbr.rel (%p355) target = $region60
      $region59: #{vae_forward.1} parent=55 // pred_region
        %s358 = smul.u32 19, %s18
        %p359 = scmp.lt.s32.totalorder %s358, 37
        %s360 = scalar_select %p359, %s358, 37
        %s361 = smul.addr %s360, 8
        %s362 = scalar_lea.vmem %s0, %s361
        %s363 = smul.u32 19, %s18
      $region60: #{vae_forward.1} parent=55 // pred_fallthru
        _
      // Predicated region
      $region61: #{vae_forward.1} parent=55 // pred_check
        %p364 = pneg %p64
      $region62: #{vae_forward.1} parent=55 // pred_check_branch
        %366 = sbr.rel (%p364) target = $region64
      $region63: #{vae_forward.1} parent=55 // pred_region
        %s367 = smul.u32 19, %s18
        %p368 = scmp.lt.s32.totalorder %s367, 37
        %s369 = scalar_select %p368, %s367, 37
        %s370 = smul.addr %s369, 8
        %s371 = scalar_lea.vmem %s1, %s370
        %s372 = smul.u32 19, %s18
      $region64: #{vae_forward.1} parent=55 // pred_fallthru
        _
    $region56: #{vae_forward.1} parent=5 // pred_fallthru
      _
    %p373 = scmp.le.s32.totalorder 1, %s18
    %p374 = scmp.lt.s32.totalorder %s18, 3
    %p375 = pnand %p373, %p374
    %p376 = pneg %p375
    // Predicated region
    $region65: #{vae_forward.1} parent=5 // pred_check
      _
    $region66: #{vae_forward.1} parent=5 // pred_check_branch
      %378 = sbr.rel (%p375) target = $region68
    $region67: #{vae_forward.1} parent=5 // pred_region
      %s379 = ssub.s32 %s18, 1
      %s380 = smul.u32 19, %s23
      %p381 = scmp.lt.s32.totalorder %s380, 37
      %s382 = scalar_select %p381, %s380, 37
      %s383 = smul.addr %s382, 8
      %s384 = scalar_lea.vmem %s0, %s383
      %p385 = pneg %p44
      %p386 = pneg %p41
      %s387 = smul.u32 19, %s23
      %p388 = scmp.lt.s32.totalorder %s387, 37
      %s389 = scalar_select %p388, %s387, 37
      %s390 = smul.addr %s389, 8
      %s391 = scalar_lea.vmem %s1, %s390
      %p392 = pneg %p70
      %p393 = pneg %p67
      %p394 = pneg %p91
      %p395 = pneg %p88
      %p396 = pneg %p112
      %p397 = pneg %p109
      %p398 = pneg %p133
      %p399 = pneg %p130
      %p400 = pneg %p154
      %p401 = pneg %p151
      %p402 = pneg %p175
      %p403 = pneg %p172
      %p404 = pneg %p196
      %p405 = pneg %p193
      %p406 = pneg %p217
      %p407 = pneg %p214
      %p408 = pneg %p238
      %p409 = pneg %p235
      %p410 = pneg %p259
      %p411 = pneg %p256
      %p412 = pneg %p280
      %p413 = pneg %p277
      %p414 = pneg %p306
      %p415 = pneg %p303
      %s416 = smul.u32 19, %s23
      %p417 = scmp.lt.s32.totalorder %s416, 37
      %s418 = scalar_select %p417, %s416, 37
      %s419 = smul.addr %s418, 8
      %s420 = scalar_lea.vmem %s12, %s419
      %s421 = smul.u32 19, %s23
      %p422 = scmp.lt.s32.totalorder %s421, 37
      %s423 = scalar_select %p422, %s421, 37
      %s424 = smul.addr %s423, 8
      %s425 = scalar_lea.vmem %s0, %s424
      %s426 = smul.u32 19, %s23
      %s427 = smul.u32 19, %s23
      %p428 = scmp.lt.s32.totalorder %s427, 37
      %s429 = scalar_select %p428, %s427, 37
      %s430 = smul.addr %s429, 8
      %s431 = scalar_lea.vmem %s1, %s430
      %s432 = smul.u32 19, %s23
      %s433 = smul.u32 19, %s23
      %p434 = scmp.lt.s32.totalorder %s433, 37
      %s435 = scalar_select %p434, %s433, 37
      %s436 = smul.addr %s435, 8
      %s437 = scalar_lea.vmem %s12, %s436
      %s438 = smul.u32 19, %s23
      %v439 = vld [vmem:[%s425] sm:$0xff]
      %v440 = vld [vmem:[%s425 + $0x8] sm:$0xff]
      %v441 = vld [vmem:[%s425 + $0x10] sm:$0xff]
      %v442 = vld [vmem:[%s425 + $0x18] sm:$0xff]
      %v443 = vld [vmem:[%s425 + $0x20] sm:$0xff]
      %v444 = vld [vmem:[%s425 + $0x28] sm:$0xff]
      %v445 = vld [vmem:[%s425 + $0x30] sm:$0xff]
      %v446 = vld [vmem:[%s425 + $0x38] sm:$0xff]
      %v447 = vld [vmem:[%s425 + $0x40] sm:$0xff]
      %v448 = vld [vmem:[%s425 + $0x48] sm:$0xff]
      %v449 = vld [vmem:[%s425 + $0x50] sm:$0xff]
      %v450 = vld [vmem:[%s425 + $0x58] sm:$0xff]
      %v451 = vld [vmem:[%s425 + $0x60] sm:$0xff]
      %v452 = vld [vmem:[%s425 + $0x68] sm:$0xff]
      %v453 = vld [vmem:[%s425 + $0x70] sm:$0xff]
      %v454 = vld [vmem:[%s425 + $0x78] sm:$0xff]
      %v455 = vld [vmem:[%s425 + $0x80] sm:$0xff]
      %v456 = vld [vmem:[%s425 + $0x88] sm:$0xff]
      %v457 = vld [vmem:[%s425 + $0x90] sm:$0xff]
      %v458 = vld [vmem:[%s3] sm:$0xff]
      %v459 = vld [vmem:[%s3 + $0x8] sm:$0xff]
      %v460 = vld [vmem:[%s3 + $0x10] sm:$0xff]
      %v461 = vld [vmem:[%s4] sm:$0x1]
      %v463 = vlaneseq
      %v464 = vshrl.u32 %v463, 7
      %v465 = vsub.s32 0, %v464
      %v466 = vrot.slane %v461, %v465
      %vm468 = vcmask 195584
      %v470 = vsel %vm468, %v439, 0
      %v473 = vsel %vm468, %v440, 0
      %v476 = vsel %vm468, %v441, 0
      %v479 = vsel %vm468, %v442, 0
      %v482 = vsel %vm468, %v443, 0
      %v485 = vsel %vm468, %v444, 0
      %v488 = vsel %vm468, %v445, 0
      %v491 = vsel %vm468, %v446, 0
      %v494 = vsel %vm468, %v447, 0
      %v497 = vsel %vm468, %v448, 0
      %v500 = vsel %vm468, %v449, 0
      %v503 = vsel %vm468, %v450, 0
      %v506 = vsel %vm468, %v451, 0
      %v509 = vsel %vm468, %v452, 0
      %v512 = vsel %vm468, %v453, 0
      %v515 = vsel %vm468, %v454, 0
      %v518 = vsel %vm468, %v455, 0
      %v521 = vsel %vm468, %v456, 0
      %v524 = vsel %vm468, %v457, 0
      %526 = vmatprep.subr.mxu0 0.0
      %527 = vmatpush1.msra.mxu0 0.0
      %528 = vmatprep.subr.mxu0 0.0
      %529 = vmatpush1.msra.mxu0 0.0
      %530 = vmatprep.subr.mxu0 0.0
      %531 = vmatpush1.msra.mxu0 0.0
      %532 = vmatprep.subr.mxu0 0.0
      %533 = vmatpush1.msra.mxu0 0.0
      %534 = vmatprep.subr.mxu0 0.0
      %535 = vmatpush1.msra.mxu0 0.0
      %536 = vmatprep.subr.mxu0 0.0
      %537 = vmatpush1.msra.mxu0 0.0
      %538 = vmatprep.subr.mxu0 0.0
      %539 = vmatpush1.msra.mxu0 0.0
      %540 = vmatprep.subr.mxu0 0.0
      %541 = vmatpush1.msra.mxu0 0.0
      %542 = vmatprep.subr.mxu0 0.0
      %543 = vmatpush1.msra.mxu0 0.0
      %544 = vmatprep.subr.mxu0 0.0
      %545 = vmatpush1.msra.mxu0 0.0
      %546 = vmatprep.subr.mxu0 0.0
      %547 = vmatpush1.msra.mxu0 0.0
      %548 = vmatprep.subr.mxu0 0.0
      %549 = vmatpush1.msra.mxu0 0.0
      %550 = vmatprep.subr.mxu0 0.0
      %551 = vmatpush1.msra.mxu0 0.0
      %552 = vmatprep.subr.mxu0 0.0
      %553 = vmatpush1.msra.mxu0 %v460
      %554 = vmatprep.subr.mxu0 0.0
      %555 = vmatpush1.msra.mxu0 %v459
      %556 = vmatprep.subr.mxu0 0.0
      %557 = vmatpush1.msra.mxu0 %v458
      %558 = vmatprep.subr.mxu0 0.0
      %559 = vmatpush2.msra.mxu0 0.0
      %560 = vmatprep.subr.mxu0 0.0
      %561 = vmatpush2.msra.mxu0 0.0
      %562 = vmatprep.subr.mxu0 0.0
      %563 = vmatpush2.msra.mxu0 0.0
      %564 = vmatprep.subr.mxu0 0.0
      %565 = vmatpush2.msra.mxu0 0.0
      %566 = vmatprep.subr.mxu0 0.0
      %567 = vmatpush2.msra.mxu0 0.0
      %568 = vmatprep.subr.mxu0 0.0
      %569 = vmatpush2.msra.mxu0 0.0
      %570 = vmatprep.subr.mxu0 0.0
      %571 = vmatpush2.msra.mxu0 0.0
      %572 = vmatprep.subr.mxu0 0.0
      %573 = vmatpush2.msra.mxu0 0.0
      %574 = vmatprep.subr.mxu0 0.0
      %575 = vmatpush2.msra.mxu0 0.0
      %576 = vmatprep.subr.mxu0 0.0
      %577 = vmatpush2.msra.mxu0 0.0
      %578 = vmatprep.subr.mxu0 0.0
      %579 = vmatpush2.msra.mxu0 0.0
      %580 = vmatprep.subr.mxu0 0.0
      %581 = vmatpush2.msra.mxu0 0.0
      %582 = vmatprep.subr.mxu0 0.0
      %583 = vmatpush2.msra.mxu0 0.0
      %584 = vmatprep.subr.mxu0 0.0
      %585 = vmatpush2.msra.mxu0 0.0
      %586 = vmatprep.subr.mxu0 0.0
      %587 = vmatpush2.msra.mxu0 0.0
      %588 = vmatprep.subr.mxu0 0.0
      %589 = vmatpush2.msra.mxu0 0.0
      %590 = vmatprep.mubr.f32.mxu0 0.0
      %591 = vmatmul.mubr.f32.gmra.mxu0 %v470
      %v592 = vpop.f32.mrf.mxu0
      %v593 = vadd.f32 %v466, %v592
      %v594 = vpop.f32.mrf.mxu0
      %595 = vmatprep.mubr.f32.mxu0 0.0
      %596 = vmatmul.mubr.f32.gmra.mxu0 %v473
      %v597 = vpop.f32.mrf.mxu0
      %v598 = vadd.f32 %v466, %v597
      %v599 = vpop.f32.mrf.mxu0
      %600 = vmatprep.mubr.f32.mxu0 0.0
      %601 = vmatmul.mubr.f32.gmra.mxu0 %v476
      %v602 = vpop.f32.mrf.mxu0
      %v603 = vadd.f32 %v466, %v602
      %v604 = vpop.f32.mrf.mxu0
      %605 = vmatprep.mubr.f32.mxu0 0.0
      %606 = vmatmul.mubr.f32.gmra.mxu0 %v479
      %v607 = vpop.f32.mrf.mxu0
      %v608 = vadd.f32 %v466, %v607
      %v609 = vpop.f32.mrf.mxu0
      %610 = vmatprep.mubr.f32.mxu0 0.0
      %611 = vmatmul.mubr.f32.gmra.mxu0 %v482
      %v612 = vpop.f32.mrf.mxu0
      %v613 = vadd.f32 %v466, %v612
      %v614 = vpop.f32.mrf.mxu0
      %615 = vmatprep.mubr.f32.mxu0 0.0
      %616 = vmatmul.mubr.f32.gmra.mxu0 %v485
      %v617 = vpop.f32.mrf.mxu0
      %v618 = vadd.f32 %v466, %v617
      %v619 = vpop.f32.mrf.mxu0
      %620 = vmatprep.mubr.f32.mxu0 0.0
      %621 = vmatmul.mubr.f32.gmra.mxu0 %v488
      %v622 = vpop.f32.mrf.mxu0
      %v623 = vadd.f32 %v466, %v622
      %v624 = vpop.f32.mrf.mxu0
      %625 = vmatprep.mubr.f32.mxu0 0.0
      %626 = vmatmul.mubr.f32.gmra.mxu0 %v491
      %v627 = vpop.f32.mrf.mxu0
      %v628 = vadd.f32 %v466, %v627
      %v629 = vpop.f32.mrf.mxu0
      %630 = vmatprep.mubr.f32.mxu0 0.0
      %631 = vmatmul.mubr.f32.gmra.mxu0 %v494
      %v632 = vpop.f32.mrf.mxu0
      %v633 = vadd.f32 %v466, %v632
      %v634 = vpop.f32.mrf.mxu0
      %635 = vmatprep.mubr.f32.mxu0 0.0
      %636 = vmatmul.mubr.f32.gmra.mxu0 %v497
      %v637 = vpop.f32.mrf.mxu0
      %v638 = vadd.f32 %v466, %v637
      %v639 = vpop.f32.mrf.mxu0
      %640 = vmatprep.mubr.f32.mxu0 0.0
      %641 = vmatmul.mubr.f32.gmra.mxu0 %v500
      %v642 = vpop.f32.mrf.mxu0
      %v643 = vadd.f32 %v466, %v642
      %v644 = vpop.f32.mrf.mxu0
      %645 = vmatprep.mubr.f32.mxu0 0.0
      %646 = vmatmul.mubr.f32.gmra.mxu0 %v503
      %v647 = vpop.f32.mrf.mxu0
      %v648 = vadd.f32 %v466, %v647
      %v649 = vpop.f32.mrf.mxu0
      %650 = vmatprep.mubr.f32.mxu0 0.0
      %651 = vmatmul.mubr.f32.gmra.mxu0 %v506
      %v652 = vpop.f32.mrf.mxu0
      %v653 = vadd.f32 %v466, %v652
      %v654 = vpop.f32.mrf.mxu0
      %655 = vmatprep.mubr.f32.mxu0 0.0
      %656 = vmatmul.mubr.f32.gmra.mxu0 %v509
      %v657 = vpop.f32.mrf.mxu0
      %v658 = vadd.f32 %v466, %v657
      %v659 = vpop.f32.mrf.mxu0
      %660 = vmatprep.mubr.f32.mxu0 0.0
      %661 = vmatmul.mubr.f32.gmra.mxu0 %v512
      %v662 = vpop.f32.mrf.mxu0
      %v663 = vadd.f32 %v466, %v662
      %v664 = vpop.f32.mrf.mxu0
      %665 = vmatprep.mubr.f32.mxu0 0.0
      %666 = vmatmul.mubr.f32.gmra.mxu0 %v515
      %v667 = vpop.f32.mrf.mxu0
      %v668 = vadd.f32 %v466, %v667
      %v669 = vpop.f32.mrf.mxu0
      %670 = vmatprep.mubr.f32.mxu0 0.0
      %671 = vmatmul.mubr.f32.gmra.mxu0 %v518
      %v672 = vpop.f32.mrf.mxu0
      %v673 = vadd.f32 %v466, %v672
      %v674 = vpop.f32.mrf.mxu0
      %675 = vmatprep.mubr.f32.mxu0 0.0
      %676 = vmatmul.mubr.f32.gmra.mxu0 %v521
      %v677 = vpop.f32.mrf.mxu0
      %v678 = vadd.f32 %v466, %v677
      %v679 = vpop.f32.mrf.mxu0
      %680 = vmatprep.mubr.f32.mxu0 0.0
      %681 = vmatmul.mubr.f32.gmra.mxu0 %v524
      %v682 = vpop.f32.mrf.mxu0
      %v683 = vadd.f32 %v466, %v682
      %v684 = vpop.f32.mrf.mxu0
      %685 = vdwg.mxu0
      %v686 = vmax.f32 %v593, 0.0
      %v687 = vmax.f32 %v598, 0.0
      %v688 = vmax.f32 %v603, 0.0
      %v689 = vmax.f32 %v608, 0.0
      %v690 = vmax.f32 %v613, 0.0
      %v691 = vmax.f32 %v618, 0.0
      %v692 = vmax.f32 %v623, 0.0
      %v693 = vmax.f32 %v628, 0.0
      %v694 = vmax.f32 %v633, 0.0
      %v695 = vmax.f32 %v638, 0.0
      %v696 = vmax.f32 %v643, 0.0
      %v697 = vmax.f32 %v648, 0.0
      %v698 = vmax.f32 %v653, 0.0
      %v699 = vmax.f32 %v658, 0.0
      %v700 = vmax.f32 %v663, 0.0
      %v701 = vmax.f32 %v668, 0.0
      %v702 = vmax.f32 %v673, 0.0
      %v703 = vmax.f32 %v678, 0.0
      %v704 = vmax.f32 %v683, 0.0
      %v705 = vld [vmem:[%s5] sm:$0xff]
      %v706 = vld [vmem:[%s5 + $0x8] sm:$0xff]
      %v707 = vld [vmem:[%s5 + $0x10] sm:$0xff]
      %v708 = vld [vmem:[%s5 + $0x18] sm:$0xff]
      %v709 = vld [vmem:[%s6] sm:$0x1]
      %v711 = vlaneseq
      %v712 = vshrl.u32 %v711, 7
      %v713 = vsub.s32 0, %v712
      %v714 = vrot.slane %v709, %v713
      %vm716 = vcmask 261120
      %v718 = vsel %vm716, %v686, 0
      %v721 = vsel %vm716, %v687, 0
      %v724 = vsel %vm716, %v688, 0
      %v727 = vsel %vm716, %v689, 0
      %v730 = vsel %vm716, %v690, 0
      %v733 = vsel %vm716, %v691, 0
      %v736 = vsel %vm716, %v692, 0
      %v739 = vsel %vm716, %v693, 0
      %v742 = vsel %vm716, %v694, 0
      %v745 = vsel %vm716, %v695, 0
      %v748 = vsel %vm716, %v696, 0
      %v751 = vsel %vm716, %v697, 0
      %v754 = vsel %vm716, %v698, 0
      %v757 = vsel %vm716, %v699, 0
      %v760 = vsel %vm716, %v700, 0
      %v763 = vsel %vm716, %v701, 0
      %v766 = vsel %vm716, %v702, 0
      %v769 = vsel %vm716, %v703, 0
      %v772 = vsel %vm716, %v704, 0
      %774 = vmatprep.subr.mxu0 0.0
      %775 = vmatpush1.msra.mxu0 0.0
      %776 = vmatprep.subr.mxu0 0.0
      %777 = vmatpush1.msra.mxu0 0.0
      %778 = vmatprep.subr.mxu0 0.0
      %779 = vmatpush1.msra.mxu0 0.0
      %780 = vmatprep.subr.mxu0 0.0
      %781 = vmatpush1.msra.mxu0 0.0
      %782 = vmatprep.subr.mxu0 0.0
      %783 = vmatpush1.msra.mxu0 0.0
      %784 = vmatprep.subr.mxu0 0.0
      %785 = vmatpush1.msra.mxu0 0.0
      %786 = vmatprep.subr.mxu0 0.0
      %787 = vmatpush1.msra.mxu0 0.0
      %788 = vmatprep.subr.mxu0 0.0
      %789 = vmatpush1.msra.mxu0 0.0
      %790 = vmatprep.subr.mxu0 0.0
      %791 = vmatpush1.msra.mxu0 0.0
      %792 = vmatprep.subr.mxu0 0.0
      %793 = vmatpush1.msra.mxu0 0.0
      %794 = vmatprep.subr.mxu0 0.0
      %795 = vmatpush1.msra.mxu0 0.0
      %796 = vmatprep.subr.mxu0 0.0
      %797 = vmatpush1.msra.mxu0 0.0
      %798 = vmatprep.subr.mxu0 0.0
      %799 = vmatpush1.msra.mxu0 %v708
      %800 = vmatprep.subr.mxu0 0.0
      %801 = vmatpush1.msra.mxu0 %v707
      %802 = vmatprep.subr.mxu0 0.0
      %803 = vmatpush1.msra.mxu0 %v706
      %804 = vmatprep.subr.mxu0 0.0
      %805 = vmatpush1.msra.mxu0 %v705
      %806 = vmatprep.subr.mxu0 0.0
      %807 = vmatpush2.msra.mxu0 0.0
      %808 = vmatprep.subr.mxu0 0.0
      %809 = vmatpush2.msra.mxu0 0.0
      %810 = vmatprep.subr.mxu0 0.0
      %811 = vmatpush2.msra.mxu0 0.0
      %812 = vmatprep.subr.mxu0 0.0
      %813 = vmatpush2.msra.mxu0 0.0
      %814 = vmatprep.subr.mxu0 0.0
      %815 = vmatpush2.msra.mxu0 0.0
      %816 = vmatprep.subr.mxu0 0.0
      %817 = vmatpush2.msra.mxu0 0.0
      %818 = vmatprep.subr.mxu0 0.0
      %819 = vmatpush2.msra.mxu0 0.0
      %820 = vmatprep.subr.mxu0 0.0
      %821 = vmatpush2.msra.mxu0 0.0
      %822 = vmatprep.subr.mxu0 0.0
      %823 = vmatpush2.msra.mxu0 0.0
      %824 = vmatprep.subr.mxu0 0.0
      %825 = vmatpush2.msra.mxu0 0.0
      %826 = vmatprep.subr.mxu0 0.0
      %827 = vmatpush2.msra.mxu0 0.0
      %828 = vmatprep.subr.mxu0 0.0
      %829 = vmatpush2.msra.mxu0 0.0
      %830 = vmatprep.subr.mxu0 0.0
      %831 = vmatpush2.msra.mxu0 0.0
      %832 = vmatprep.subr.mxu0 0.0
      %833 = vmatpush2.msra.mxu0 0.0
      %834 = vmatprep.subr.mxu0 0.0
      %835 = vmatpush2.msra.mxu0 0.0
      %836 = vmatprep.subr.mxu0 0.0
      %837 = vmatpush2.msra.mxu0 0.0
      %838 = vmatprep.mubr.f32.mxu0 0.0
      %839 = vmatmul.mubr.f32.gmra.mxu0 %v718
      %v840 = vpop.f32.mrf.mxu0
      %v841 = vadd.f32 %v714, %v840
      %v842 = vpop.f32.mrf.mxu0
      %843 = vmatprep.mubr.f32.mxu0 0.0
      %844 = vmatmul.mubr.f32.gmra.mxu0 %v721
      %v845 = vpop.f32.mrf.mxu0
      %v846 = vadd.f32 %v714, %v845
      %v847 = vpop.f32.mrf.mxu0
      %848 = vmatprep.mubr.f32.mxu0 0.0
      %849 = vmatmul.mubr.f32.gmra.mxu0 %v724
      %v850 = vpop.f32.mrf.mxu0
      %v851 = vadd.f32 %v714, %v850
      %v852 = vpop.f32.mrf.mxu0
      %853 = vmatprep.mubr.f32.mxu0 0.0
      %854 = vmatmul.mubr.f32.gmra.mxu0 %v727
      %v855 = vpop.f32.mrf.mxu0
      %v856 = vadd.f32 %v714, %v855
      %v857 = vpop.f32.mrf.mxu0
      %858 = vmatprep.mubr.f32.mxu0 0.0
      %859 = vmatmul.mubr.f32.gmra.mxu0 %v730
      %v860 = vpop.f32.mrf.mxu0
      %v861 = vadd.f32 %v714, %v860
      %v862 = vpop.f32.mrf.mxu0
      %863 = vmatprep.mubr.f32.mxu0 0.0
      %864 = vmatmul.mubr.f32.gmra.mxu0 %v733
      %v865 = vpop.f32.mrf.mxu0
      %v866 = vadd.f32 %v714, %v865
      %v867 = vpop.f32.mrf.mxu0
      %868 = vmatprep.mubr.f32.mxu0 0.0
      %869 = vmatmul.mubr.f32.gmra.mxu0 %v736
      %v870 = vpop.f32.mrf.mxu0
      %v871 = vadd.f32 %v714, %v870
      %v872 = vpop.f32.mrf.mxu0
      %873 = vmatprep.mubr.f32.mxu0 0.0
      %874 = vmatmul.mubr.f32.gmra.mxu0 %v739
      %v875 = vpop.f32.mrf.mxu0
      %v876 = vadd.f32 %v714, %v875
      %v877 = vpop.f32.mrf.mxu0
      %878 = vmatprep.mubr.f32.mxu0 0.0
      %879 = vmatmul.mubr.f32.gmra.mxu0 %v742
      %v880 = vpop.f32.mrf.mxu0
      %v881 = vadd.f32 %v714, %v880
      %v882 = vpop.f32.mrf.mxu0
      %883 = vmatprep.mubr.f32.mxu0 0.0
      %884 = vmatmul.mubr.f32.gmra.mxu0 %v745
      %v885 = vpop.f32.mrf.mxu0
      %v886 = vadd.f32 %v714, %v885
      %v887 = vpop.f32.mrf.mxu0
      %888 = vmatprep.mubr.f32.mxu0 0.0
      %889 = vmatmul.mubr.f32.gmra.mxu0 %v748
      %v890 = vpop.f32.mrf.mxu0
      %v891 = vadd.f32 %v714, %v890
      %v892 = vpop.f32.mrf.mxu0
      %893 = vmatprep.mubr.f32.mxu0 0.0
      %894 = vmatmul.mubr.f32.gmra.mxu0 %v751
      %v895 = vpop.f32.mrf.mxu0
      %v896 = vadd.f32 %v714, %v895
      %v897 = vpop.f32.mrf.mxu0
      %898 = vmatprep.mubr.f32.mxu0 0.0
      %899 = vmatmul.mubr.f32.gmra.mxu0 %v754
      %v900 = vpop.f32.mrf.mxu0
      %v901 = vadd.f32 %v714, %v900
      %v902 = vpop.f32.mrf.mxu0
      %903 = vmatprep.mubr.f32.mxu0 0.0
      %904 = vmatmul.mubr.f32.gmra.mxu0 %v757
      %v905 = vpop.f32.mrf.mxu0
      %v906 = vadd.f32 %v714, %v905
      %v907 = vpop.f32.mrf.mxu0
      %908 = vmatprep.mubr.f32.mxu0 0.0
      %909 = vmatmul.mubr.f32.gmra.mxu0 %v760
      %v910 = vpop.f32.mrf.mxu0
      %v911 = vadd.f32 %v714, %v910
      %v912 = vpop.f32.mrf.mxu0
      %913 = vmatprep.mubr.f32.mxu0 0.0
      %914 = vmatmul.mubr.f32.gmra.mxu0 %v763
      %v915 = vpop.f32.mrf.mxu0
      %v916 = vadd.f32 %v714, %v915
      %v917 = vpop.f32.mrf.mxu0
      %918 = vmatprep.mubr.f32.mxu0 0.0
      %919 = vmatmul.mubr.f32.gmra.mxu0 %v766
      %v920 = vpop.f32.mrf.mxu0
      %v921 = vadd.f32 %v714, %v920
      %v922 = vpop.f32.mrf.mxu0
      %923 = vmatprep.mubr.f32.mxu0 0.0
      %924 = vmatmul.mubr.f32.gmra.mxu0 %v769
      %v925 = vpop.f32.mrf.mxu0
      %v926 = vadd.f32 %v714, %v925
      %v927 = vpop.f32.mrf.mxu0
      %928 = vmatprep.mubr.f32.mxu0 0.0
      %929 = vmatmul.mubr.f32.gmra.mxu0 %v772
      %v930 = vpop.f32.mrf.mxu0
      %v931 = vadd.f32 %v714, %v930
      %v932 = vpop.f32.mrf.mxu0
      %933 = vdwg.mxu0
      %v934 = vmul.f32 %v841, 0.5
      %v935 = vmul.f32 %v846, 0.5
      %v936 = vmul.f32 %v851, 0.5
      %v937 = vmul.f32 %v856, 0.5
      %v938 = vmul.f32 %v861, 0.5
      %v939 = vmul.f32 %v866, 0.5
      %v940 = vmul.f32 %v871, 0.5
      %v941 = vmul.f32 %v876, 0.5
      %v942 = vmul.f32 %v881, 0.5
      %v943 = vmul.f32 %v886, 0.5
      %v944 = vmul.f32 %v891, 0.5
      %v945 = vmul.f32 %v896, 0.5
      %v946 = vmul.f32 %v901, 0.5
      %v947 = vmul.f32 %v906, 0.5
      %v948 = vmul.f32 %v911, 0.5
      %v949 = vmul.f32 %v916, 0.5
      %v950 = vmul.f32 %v921, 0.5
      %v951 = vmul.f32 %v926, 0.5
      %v952 = vmul.f32 %v931, 0.5
      %v953 = vmul.f32 %v934, 1.442695
      %v954 = vpow.pop %v953
      %v955 = vmul.f32 %v935, 1.442695
      %v956 = vpow.pop %v955
      %v957 = vmul.f32 %v936, 1.442695
      %v958 = vpow.pop %v957
      %v959 = vmul.f32 %v937, 1.442695
      %v960 = vpow.pop %v959
      %v961 = vmul.f32 %v938, 1.442695
      %v962 = vpow.pop %v961
      %v963 = vmul.f32 %v939, 1.442695
      %v964 = vpow.pop %v963
      %v965 = vmul.f32 %v940, 1.442695
      %v966 = vpow.pop %v965
      %v967 = vmul.f32 %v941, 1.442695
      %v968 = vpow.pop %v967
      %v969 = vmul.f32 %v942, 1.442695
      %v970 = vpow.pop %v969
      %v971 = vmul.f32 %v943, 1.442695
      %v972 = vpow.pop %v971
      %v973 = vmul.f32 %v944, 1.442695
      %v974 = vpow.pop %v973
      %v975 = vmul.f32 %v945, 1.442695
      %v976 = vpow.pop %v975
      %v977 = vmul.f32 %v946, 1.442695
      %v978 = vpow.pop %v977
      %v979 = vmul.f32 %v947, 1.442695
      %v980 = vpow.pop %v979
      %v981 = vmul.f32 %v948, 1.442695
      %v982 = vpow.pop %v981
      %v983 = vmul.f32 %v949, 1.442695
      %v984 = vpow.pop %v983
      %v985 = vmul.f32 %v950, 1.442695
      %v986 = vpow.pop %v985
      %v987 = vmul.f32 %v951, 1.442695
      %v988 = vpow.pop %v987
      %v989 = vmul.f32 %v952, 1.442695
      %v990 = vpow.pop %v989
      %v991 = vld [vmem:[%s431] sm:$0xff]
      %v992 = vld [vmem:[%s431 + $0x8] sm:$0xff]
      %v993 = vld [vmem:[%s431 + $0x10] sm:$0xff]
      %v994 = vld [vmem:[%s431 + $0x18] sm:$0xff]
      %v995 = vld [vmem:[%s431 + $0x20] sm:$0xff]
      %v996 = vld [vmem:[%s431 + $0x28] sm:$0xff]
      %v997 = vld [vmem:[%s431 + $0x30] sm:$0xff]
      %v998 = vld [vmem:[%s431 + $0x38] sm:$0xff]
      %v999 = vld [vmem:[%s431 + $0x40] sm:$0xff]
      %v1000 = vld [vmem:[%s431 + $0x48] sm:$0xff]
      %v1001 = vld [vmem:[%s431 + $0x50] sm:$0xff]
      %v1002 = vld [vmem:[%s431 + $0x58] sm:$0xff]
      %v1003 = vld [vmem:[%s431 + $0x60] sm:$0xff]
      %v1004 = vld [vmem:[%s431 + $0x68] sm:$0xff]
      %v1005 = vld [vmem:[%s431 + $0x70] sm:$0xff]
      %v1006 = vld [vmem:[%s431 + $0x78] sm:$0xff]
      %v1007 = vld [vmem:[%s431 + $0x80] sm:$0xff]
      %v1008 = vld [vmem:[%s431 + $0x88] sm:$0xff]
      %v1009 = vld [vmem:[%s431 + $0x90] sm:$0xff]
      %v1010 = vmul.f32 %v954, %v991
      %v1011 = vmul.f32 %v956, %v992
      %v1012 = vmul.f32 %v958, %v993
      %v1013 = vmul.f32 %v960, %v994
      %v1014 = vmul.f32 %v962, %v995
      %v1015 = vmul.f32 %v964, %v996
      %v1016 = vmul.f32 %v966, %v997
      %v1017 = vmul.f32 %v968, %v998
      %v1018 = vmul.f32 %v970, %v999
      %v1019 = vmul.f32 %v972, %v1000
      %v1020 = vmul.f32 %v974, %v1001
      %v1021 = vmul.f32 %v976, %v1002
      %v1022 = vmul.f32 %v978, %v1003
      %v1023 = vmul.f32 %v980, %v1004
      %v1024 = vmul.f32 %v982, %v1005
      %v1025 = vmul.f32 %v984, %v1006
      %v1026 = vmul.f32 %v986, %v1007
      %v1027 = vmul.f32 %v988, %v1008
      %v1028 = vmul.f32 %v990, %v1009
      %1048 = vrot.lane.b32.xlu0 %v1010, 8
      %v1049 = vpop.permute.xlu0 %1048
      %1050 = vrot.lane.b32.xlu0 %v1011, 8
      %v1051 = vpop.permute.xlu0 %1050
      %1052 = vrot.lane.b32.xlu0 %v1012, 8
      %v1053 = vpop.permute.xlu0 %1052
      %1054 = vrot.lane.b32.xlu0 %v1013, 8
      %v1055 = vpop.permute.xlu0 %1054
      %1056 = vrot.lane.b32.xlu0 %v1014, 8
      %v1057 = vpop.permute.xlu0 %1056
      %1058 = vrot.lane.b32.xlu0 %v1015, 8
      %v1059 = vpop.permute.xlu0 %1058
      %1060 = vrot.lane.b32.xlu0 %v1016, 8
      %v1061 = vpop.permute.xlu0 %1060
      %1062 = vrot.lane.b32.xlu0 %v1017, 8
      %v1063 = vpop.permute.xlu0 %1062
      %1064 = vrot.lane.b32.xlu0 %v1018, 8
      %v1065 = vpop.permute.xlu0 %1064
      %1066 = vrot.lane.b32.xlu0 %v1019, 8
      %v1067 = vpop.permute.xlu0 %1066
      %1068 = vrot.lane.b32.xlu0 %v1020, 8
      %v1069 = vpop.permute.xlu0 %1068
      %1070 = vrot.lane.b32.xlu0 %v1021, 8
      %v1071 = vpop.permute.xlu0 %1070
      %1072 = vrot.lane.b32.xlu0 %v1022, 8
      %v1073 = vpop.permute.xlu0 %1072
      %1074 = vrot.lane.b32.xlu0 %v1023, 8
      %v1075 = vpop.permute.xlu0 %1074
      %1076 = vrot.lane.b32.xlu0 %v1024, 8
      %v1077 = vpop.permute.xlu0 %1076
      %1078 = vrot.lane.b32.xlu0 %v1025, 8
      %v1079 = vpop.permute.xlu0 %1078
      %1080 = vrot.lane.b32.xlu0 %v1026, 8
      %v1081 = vpop.permute.xlu0 %1080
      %1082 = vrot.lane.b32.xlu0 %v1027, 8
      %v1083 = vpop.permute.xlu0 %1082
      %1084 = vrot.lane.b32.xlu0 %v1028, 8
      %v1085 = vpop.permute.xlu0 %1084
      %v1105 = vadd.f32 %v841, %v1049
      %v1106 = vadd.f32 %v846, %v1051
      %v1107 = vadd.f32 %v851, %v1053
      %v1108 = vadd.f32 %v856, %v1055
      %v1109 = vadd.f32 %v861, %v1057
      %v1110 = vadd.f32 %v866, %v1059
      %v1111 = vadd.f32 %v871, %v1061
      %v1112 = vadd.f32 %v876, %v1063
      %v1113 = vadd.f32 %v881, %v1065
      %v1114 = vadd.f32 %v886, %v1067
      %v1115 = vadd.f32 %v891, %v1069
      %v1116 = vadd.f32 %v896, %v1071
      %v1117 = vadd.f32 %v901, %v1073
      %v1118 = vadd.f32 %v906, %v1075
      %v1119 = vadd.f32 %v911, %v1077
      %v1120 = vadd.f32 %v916, %v1079
      %v1121 = vadd.f32 %v921, %v1081
      %v1122 = vadd.f32 %v926, %v1083
      %v1123 = vadd.f32 %v931, %v1085
      %v1124 = vld [vmem:[%s7] sm:$0xff]
      %v1125 = vld [vmem:[%s8] sm:$0xff]
      %v1126 = vld [vmem:[%s8 + $0x8] sm:$0xff]
      %v1127 = vld [vmem:[%s8 + $0x10] sm:$0xff]
      %1128 = vmatprep.subr.mxu0 0.0
      %1129 = vmatpush1.msra.mxu0 0.0
      %1130 = vmatprep.subr.mxu0 0.0
      %1131 = vmatpush1.msra.mxu0 0.0
      %1132 = vmatprep.subr.mxu0 0.0
      %1133 = vmatpush1.msra.mxu0 0.0
      %1134 = vmatprep.subr.mxu0 0.0
      %1135 = vmatpush1.msra.mxu0 0.0
      %1136 = vmatprep.subr.mxu0 0.0
      %1137 = vmatpush1.msra.mxu0 0.0
      %1138 = vmatprep.subr.mxu0 0.0
      %1139 = vmatpush1.msra.mxu0 0.0
      %1140 = vmatprep.subr.mxu0 0.0
      %1141 = vmatpush1.msra.mxu0 0.0
      %1142 = vmatprep.subr.mxu0 0.0
      %1143 = vmatpush1.msra.mxu0 0.0
      %1144 = vmatprep.subr.mxu0 0.0
      %1145 = vmatpush1.msra.mxu0 0.0
      %1146 = vmatprep.subr.mxu0 0.0
      %1147 = vmatpush1.msra.mxu0 0.0
      %1148 = vmatprep.subr.mxu0 0.0
      %1149 = vmatpush1.msra.mxu0 0.0
      %1150 = vmatprep.subr.mxu0 0.0
      %1151 = vmatpush1.msra.mxu0 0.0
      %1152 = vmatprep.subr.mxu0 0.0
      %1153 = vmatpush1.msra.mxu0 0.0
      %1154 = vmatprep.subr.mxu0 0.0
      %1155 = vmatpush1.msra.mxu0 %v1127
      %1156 = vmatprep.subr.mxu0 0.0
      %1157 = vmatpush1.msra.mxu0 %v1126
      %1158 = vmatprep.subr.mxu0 0.0
      %1159 = vmatpush1.msra.mxu0 %v1125
      %1160 = vmatprep.subr.mxu0 0.0
      %1161 = vmatpush2.msra.mxu0 0.0
      %1162 = vmatprep.subr.mxu0 0.0
      %1163 = vmatpush2.msra.mxu0 0.0
      %1164 = vmatprep.subr.mxu0 0.0
      %1165 = vmatpush2.msra.mxu0 0.0
      %1166 = vmatprep.subr.mxu0 0.0
      %1167 = vmatpush2.msra.mxu0 0.0
      %1168 = vmatprep.subr.mxu0 0.0
      %1169 = vmatpush2.msra.mxu0 0.0
      %1170 = vmatprep.subr.mxu0 0.0
      %1171 = vmatpush2.msra.mxu0 0.0
      %1172 = vmatprep.subr.mxu0 0.0
      %1173 = vmatpush2.msra.mxu0 0.0
      %1174 = vmatprep.subr.mxu0 0.0
      %1175 = vmatpush2.msra.mxu0 0.0
      %1176 = vmatprep.subr.mxu0 0.0
      %1177 = vmatpush2.msra.mxu0 0.0
      %1178 = vmatprep.subr.mxu0 0.0
      %1179 = vmatpush2.msra.mxu0 0.0
      %1180 = vmatprep.subr.mxu0 0.0
      %1181 = vmatpush2.msra.mxu0 0.0
      %1182 = vmatprep.subr.mxu0 0.0
      %1183 = vmatpush2.msra.mxu0 0.0
      %1184 = vmatprep.subr.mxu0 0.0
      %1185 = vmatpush2.msra.mxu0 0.0
      %1186 = vmatprep.subr.mxu0 0.0
      %1187 = vmatpush2.msra.mxu0 0.0
      %1188 = vmatprep.subr.mxu0 0.0
      %1189 = vmatpush2.msra.mxu0 0.0
      %1190 = vmatprep.subr.mxu0 0.0
      %1191 = vmatpush2.msra.mxu0 0.0
      %1192 = vmatprep.mubr.f32.mxu0 0.0
      %1193 = vmatmul.mubr.f32.gmra.mxu0 %v470
      %v1194 = vpop.f32.mrf.mxu0
      %v1195 = vadd.f32 0.0, %v1194
      %v1196 = vpop.f32.mrf.mxu0
      %1197 = vmatprep.mubr.f32.mxu0 0.0
      %1198 = vmatmul.mubr.f32.gmra.mxu0 %v473
      %v1199 = vpop.f32.mrf.mxu0
      %v1200 = vadd.f32 0.0, %v1199
      %v1201 = vpop.f32.mrf.mxu0
      %1202 = vmatprep.mubr.f32.mxu0 0.0
      %1203 = vmatmul.mubr.f32.gmra.mxu0 %v476
      %v1204 = vpop.f32.mrf.mxu0
      %v1205 = vadd.f32 0.0, %v1204
      %v1206 = vpop.f32.mrf.mxu0
      %1207 = vmatprep.mubr.f32.mxu0 0.0
      %1208 = vmatmul.mubr.f32.gmra.mxu0 %v479
      %v1209 = vpop.f32.mrf.mxu0
      %v1210 = vadd.f32 0.0, %v1209
      %v1211 = vpop.f32.mrf.mxu0
      %1212 = vmatprep.mubr.f32.mxu0 0.0
      %1213 = vmatmul.mubr.f32.gmra.mxu0 %v482
      %v1214 = vpop.f32.mrf.mxu0
      %v1215 = vadd.f32 0.0, %v1214
      %v1216 = vpop.f32.mrf.mxu0
      %1217 = vmatprep.mubr.f32.mxu0 0.0
      %1218 = vmatmul.mubr.f32.gmra.mxu0 %v485
      %v1219 = vpop.f32.mrf.mxu0
      %v1220 = vadd.f32 0.0, %v1219
      %v1221 = vpop.f32.mrf.mxu0
      %1222 = vmatprep.mubr.f32.mxu0 0.0
      %1223 = vmatmul.mubr.f32.gmra.mxu0 %v488
      %v1224 = vpop.f32.mrf.mxu0
      %v1225 = vadd.f32 0.0, %v1224
      %v1226 = vpop.f32.mrf.mxu0
      %1227 = vmatprep.mubr.f32.mxu0 0.0
      %1228 = vmatmul.mubr.f32.gmra.mxu0 %v491
      %v1229 = vpop.f32.mrf.mxu0
      %v1230 = vadd.f32 0.0, %v1229
      %v1231 = vpop.f32.mrf.mxu0
      %1232 = vmatprep.mubr.f32.mxu0 0.0
      %1233 = vmatmul.mubr.f32.gmra.mxu0 %v494
      %v1234 = vpop.f32.mrf.mxu0
      %v1235 = vadd.f32 0.0, %v1234
      %v1236 = vpop.f32.mrf.mxu0
      %1237 = vmatprep.mubr.f32.mxu0 0.0
      %1238 = vmatmul.mubr.f32.gmra.mxu0 %v497
      %v1239 = vpop.f32.mrf.mxu0
      %v1240 = vadd.f32 0.0, %v1239
      %v1241 = vpop.f32.mrf.mxu0
      %1242 = vmatprep.mubr.f32.mxu0 0.0
      %1243 = vmatmul.mubr.f32.gmra.mxu0 %v500
      %v1244 = vpop.f32.mrf.mxu0
      %v1245 = vadd.f32 0.0, %v1244
      %v1246 = vpop.f32.mrf.mxu0
      %1247 = vmatprep.mubr.f32.mxu0 0.0
      %1248 = vmatmul.mubr.f32.gmra.mxu0 %v503
      %v1249 = vpop.f32.mrf.mxu0
      %v1250 = vadd.f32 0.0, %v1249
      %v1251 = vpop.f32.mrf.mxu0
      %1252 = vmatprep.mubr.f32.mxu0 0.0
      %1253 = vmatmul.mubr.f32.gmra.mxu0 %v506
      %v1254 = vpop.f32.mrf.mxu0
      %v1255 = vadd.f32 0.0, %v1254
      %v1256 = vpop.f32.mrf.mxu0
      %1257 = vmatprep.mubr.f32.mxu0 0.0
      %1258 = vmatmul.mubr.f32.gmra.mxu0 %v509
      %v1259 = vpop.f32.mrf.mxu0
      %v1260 = vadd.f32 0.0, %v1259
      %v1261 = vpop.f32.mrf.mxu0
      %1262 = vmatprep.mubr.f32.mxu0 0.0
      %1263 = vmatmul.mubr.f32.gmra.mxu0 %v512
      %v1264 = vpop.f32.mrf.mxu0
      %v1265 = vadd.f32 0.0, %v1264
      %v1266 = vpop.f32.mrf.mxu0
      %1267 = vmatprep.mubr.f32.mxu0 0.0
      %1268 = vmatmul.mubr.f32.gmra.mxu0 %v515
      %v1269 = vpop.f32.mrf.mxu0
      %v1270 = vadd.f32 0.0, %v1269
      %v1271 = vpop.f32.mrf.mxu0
      %1272 = vmatprep.mubr.f32.mxu0 0.0
      %1273 = vmatmul.mubr.f32.gmra.mxu0 %v518
      %v1274 = vpop.f32.mrf.mxu0
      %v1275 = vadd.f32 0.0, %v1274
      %v1276 = vpop.f32.mrf.mxu0
      %1277 = vmatprep.mubr.f32.mxu0 0.0
      %1278 = vmatmul.mubr.f32.gmra.mxu0 %v521
      %v1279 = vpop.f32.mrf.mxu0
      %v1280 = vadd.f32 0.0, %v1279
      %v1281 = vpop.f32.mrf.mxu0
      %1282 = vmatprep.mubr.f32.mxu0 0.0
      %1283 = vmatmul.mubr.f32.gmra.mxu0 %v524
      %v1284 = vpop.f32.mrf.mxu0
      %v1285 = vadd.f32 0.0, %v1284
      %v1286 = vpop.f32.mrf.mxu0
      %1287 = vdwg.mxu0
      %1307 = vrot.lane.b32.xlu0 %v1105, 120
      %v1308 = vpop.permute.xlu0 %1307
      %1309 = vrot.lane.b32.xlu0 %v1106, 120
      %v1310 = vpop.permute.xlu0 %1309
      %1311 = vrot.lane.b32.xlu0 %v1107, 120
      %v1312 = vpop.permute.xlu0 %1311
      %1313 = vrot.lane.b32.xlu0 %v1108, 120
      %v1314 = vpop.permute.xlu0 %1313
      %1315 = vrot.lane.b32.xlu0 %v1109, 120
      %v1316 = vpop.permute.xlu0 %1315
      %1317 = vrot.lane.b32.xlu0 %v1110, 120
      %v1318 = vpop.permute.xlu0 %1317
      %1319 = vrot.lane.b32.xlu0 %v1111, 120
      %v1320 = vpop.permute.xlu0 %1319
      %1321 = vrot.lane.b32.xlu0 %v1112, 120
      %v1322 = vpop.permute.xlu0 %1321
      %1323 = vrot.lane.b32.xlu0 %v1113, 120
      %v1324 = vpop.permute.xlu0 %1323
      %1325 = vrot.lane.b32.xlu0 %v1114, 120
      %v1326 = vpop.permute.xlu0 %1325
      %1327 = vrot.lane.b32.xlu0 %v1115, 120
      %v1328 = vpop.permute.xlu0 %1327
      %1329 = vrot.lane.b32.xlu0 %v1116, 120
      %v1330 = vpop.permute.xlu0 %1329
      %1331 = vrot.lane.b32.xlu0 %v1117, 120
      %v1332 = vpop.permute.xlu0 %1331
      %1333 = vrot.lane.b32.xlu0 %v1118, 120
      %v1334 = vpop.permute.xlu0 %1333
      %1335 = vrot.lane.b32.xlu0 %v1119, 120
      %v1336 = vpop.permute.xlu0 %1335
      %1337 = vrot.lane.b32.xlu0 %v1120, 120
      %v1338 = vpop.permute.xlu0 %1337
      %1339 = vrot.lane.b32.xlu0 %v1121, 120
      %v1340 = vpop.permute.xlu0 %1339
      %1341 = vrot.lane.b32.xlu0 %v1122, 120
      %v1342 = vpop.permute.xlu0 %1341
      %1343 = vrot.lane.b32.xlu0 %v1123, 120
      %v1344 = vpop.permute.xlu0 %1343
      %vm1345 = vcmask 64512
      %v1346 = vsel %vm1345, %v1308, 0
      %v1348 = vsel %vm1345, %v1310, 0
      %v1350 = vsel %vm1345, %v1312, 0
      %v1352 = vsel %vm1345, %v1314, 0
      %v1354 = vsel %vm1345, %v1316, 0
      %v1356 = vsel %vm1345, %v1318, 0
      %v1358 = vsel %vm1345, %v1320, 0
      %v1360 = vsel %vm1345, %v1322, 0
      %v1362 = vsel %vm1345, %v1324, 0
      %v1364 = vsel %vm1345, %v1326, 0
      %v1366 = vsel %vm1345, %v1328, 0
      %v1368 = vsel %vm1345, %v1330, 0
      %v1370 = vsel %vm1345, %v1332, 0
      %v1372 = vsel %vm1345, %v1334, 0
      %v1374 = vsel %vm1345, %v1336, 0
      %v1376 = vsel %vm1345, %v1338, 0
      %v1378 = vsel %vm1345, %v1340, 0
      %v1380 = vsel %vm1345, %v1342, 0
      %v1382 = vsel %vm1345, %v1344, 0
      %1384 = vmatprep.subr.mxu0 0.0
      %1385 = vmatpush1.msra.mxu0 0.0
      %1386 = vmatprep.subr.mxu0 0.0
      %1387 = vmatpush1.msra.mxu0 0.0
      %1388 = vmatprep.subr.mxu0 0.0
      %1389 = vmatpush1.msra.mxu0 0.0
      %1390 = vmatprep.subr.mxu0 0.0
      %1391 = vmatpush1.msra.mxu0 0.0
      %1392 = vmatprep.subr.mxu0 0.0
      %1393 = vmatpush1.msra.mxu0 0.0
      %1394 = vmatprep.subr.mxu0 0.0
      %1395 = vmatpush1.msra.mxu0 0.0
      %1396 = vmatprep.subr.mxu0 0.0
      %1397 = vmatpush1.msra.mxu0 0.0
      %1398 = vmatprep.subr.mxu0 0.0
      %1399 = vmatpush1.msra.mxu0 0.0
      %1400 = vmatprep.subr.mxu0 0.0
      %1401 = vmatpush1.msra.mxu0 0.0
      %1402 = vmatprep.subr.mxu0 0.0
      %1403 = vmatpush1.msra.mxu0 0.0
      %1404 = vmatprep.subr.mxu0 0.0
      %1405 = vmatpush1.msra.mxu0 0.0
      %1406 = vmatprep.subr.mxu0 0.0
      %1407 = vmatpush1.msra.mxu0 0.0
      %1408 = vmatprep.subr.mxu0 0.0
      %1409 = vmatpush1.msra.mxu0 0.0
      %1410 = vmatprep.subr.mxu0 0.0
      %1411 = vmatpush1.msra.mxu0 0.0
      %1412 = vmatprep.subr.mxu0 0.0
      %1413 = vmatpush1.msra.mxu0 0.0
      %1414 = vmatprep.subr.mxu0 0.0
      %1415 = vmatpush1.msra.mxu0 %v1124
      %1416 = vmatprep.subr.mxu0 0.0
      %1417 = vmatpush2.msra.mxu0 0.0
      %1418 = vmatprep.subr.mxu0 0.0
      %1419 = vmatpush2.msra.mxu0 0.0
      %1420 = vmatprep.subr.mxu0 0.0
      %1421 = vmatpush2.msra.mxu0 0.0
      %1422 = vmatprep.subr.mxu0 0.0
      %1423 = vmatpush2.msra.mxu0 0.0
      %1424 = vmatprep.subr.mxu0 0.0
      %1425 = vmatpush2.msra.mxu0 0.0
      %1426 = vmatprep.subr.mxu0 0.0
      %1427 = vmatpush2.msra.mxu0 0.0
      %1428 = vmatprep.subr.mxu0 0.0
      %1429 = vmatpush2.msra.mxu0 0.0
      %1430 = vmatprep.subr.mxu0 0.0
      %1431 = vmatpush2.msra.mxu0 0.0
      %1432 = vmatprep.subr.mxu0 0.0
      %1433 = vmatpush2.msra.mxu0 0.0
      %1434 = vmatprep.subr.mxu0 0.0
      %1435 = vmatpush2.msra.mxu0 0.0
      %1436 = vmatprep.subr.mxu0 0.0
      %1437 = vmatpush2.msra.mxu0 0.0
      %1438 = vmatprep.subr.mxu0 0.0
      %1439 = vmatpush2.msra.mxu0 0.0
      %1440 = vmatprep.subr.mxu0 0.0
      %1441 = vmatpush2.msra.mxu0 0.0
      %1442 = vmatprep.subr.mxu0 0.0
      %1443 = vmatpush2.msra.mxu0 0.0
      %1444 = vmatprep.subr.mxu0 0.0
      %1445 = vmatpush2.msra.mxu0 0.0
      %1446 = vmatprep.subr.mxu0 0.0
      %1447 = vmatpush2.msra.mxu0 0.0
      %1448 = vmatprep.mubr.f32.mxu0 0.0
      %1449 = vmatmul.mubr.f32.gmra.mxu0 %v1346
      %v1450 = vpop.f32.mrf.mxu0
      %v1451 = vadd.f32 %v1195, %v1450
      %v1452 = vpop.f32.mrf.mxu0
      %1453 = vmatprep.mubr.f32.mxu0 0.0
      %1454 = vmatmul.mubr.f32.gmra.mxu0 %v1348
      %v1455 = vpop.f32.mrf.mxu0
      %v1456 = vadd.f32 %v1200, %v1455
      %v1457 = vpop.f32.mrf.mxu0
      %1458 = vmatprep.mubr.f32.mxu0 0.0
      %1459 = vmatmul.mubr.f32.gmra.mxu0 %v1350
      %v1460 = vpop.f32.mrf.mxu0
      %v1461 = vadd.f32 %v1205, %v1460
      %v1462 = vpop.f32.mrf.mxu0
      %1463 = vmatprep.mubr.f32.mxu0 0.0
      %1464 = vmatmul.mubr.f32.gmra.mxu0 %v1352
      %v1465 = vpop.f32.mrf.mxu0
      %v1466 = vadd.f32 %v1210, %v1465
      %v1467 = vpop.f32.mrf.mxu0
      %1468 = vmatprep.mubr.f32.mxu0 0.0
      %1469 = vmatmul.mubr.f32.gmra.mxu0 %v1354
      %v1470 = vpop.f32.mrf.mxu0
      %v1471 = vadd.f32 %v1215, %v1470
      %v1472 = vpop.f32.mrf.mxu0
      %1473 = vmatprep.mubr.f32.mxu0 0.0
      %1474 = vmatmul.mubr.f32.gmra.mxu0 %v1356
      %v1475 = vpop.f32.mrf.mxu0
      %v1476 = vadd.f32 %v1220, %v1475
      %v1477 = vpop.f32.mrf.mxu0
      %1478 = vmatprep.mubr.f32.mxu0 0.0
      %1479 = vmatmul.mubr.f32.gmra.mxu0 %v1358
      %v1480 = vpop.f32.mrf.mxu0
      %v1481 = vadd.f32 %v1225, %v1480
      %v1482 = vpop.f32.mrf.mxu0
      %1483 = vmatprep.mubr.f32.mxu0 0.0
      %1484 = vmatmul.mubr.f32.gmra.mxu0 %v1360
      %v1485 = vpop.f32.mrf.mxu0
      %v1486 = vadd.f32 %v1230, %v1485
      %v1487 = vpop.f32.mrf.mxu0
      %1488 = vmatprep.mubr.f32.mxu0 0.0
      %1489 = vmatmul.mubr.f32.gmra.mxu0 %v1362
      %v1490 = vpop.f32.mrf.mxu0
      %v1491 = vadd.f32 %v1235, %v1490
      %v1492 = vpop.f32.mrf.mxu0
      %1493 = vmatprep.mubr.f32.mxu0 0.0
      %1494 = vmatmul.mubr.f32.gmra.mxu0 %v1364
      %v1495 = vpop.f32.mrf.mxu0
      %v1496 = vadd.f32 %v1240, %v1495
      %v1497 = vpop.f32.mrf.mxu0
      %1498 = vmatprep.mubr.f32.mxu0 0.0
      %1499 = vmatmul.mubr.f32.gmra.mxu0 %v1366
      %v1500 = vpop.f32.mrf.mxu0
      %v1501 = vadd.f32 %v1245, %v1500
      %v1502 = vpop.f32.mrf.mxu0
      %1503 = vmatprep.mubr.f32.mxu0 0.0
      %1504 = vmatmul.mubr.f32.gmra.mxu0 %v1368
      %v1505 = vpop.f32.mrf.mxu0
      %v1506 = vadd.f32 %v1250, %v1505
      %v1507 = vpop.f32.mrf.mxu0
      %1508 = vmatprep.mubr.f32.mxu0 0.0
      %1509 = vmatmul.mubr.f32.gmra.mxu0 %v1370
      %v1510 = vpop.f32.mrf.mxu0
      %v1511 = vadd.f32 %v1255, %v1510
      %v1512 = vpop.f32.mrf.mxu0
      %1513 = vmatprep.mubr.f32.mxu0 0.0
      %1514 = vmatmul.mubr.f32.gmra.mxu0 %v1372
      %v1515 = vpop.f32.mrf.mxu0
      %v1516 = vadd.f32 %v1260, %v1515
      %v1517 = vpop.f32.mrf.mxu0
      %1518 = vmatprep.mubr.f32.mxu0 0.0
      %1519 = vmatmul.mubr.f32.gmra.mxu0 %v1374
      %v1520 = vpop.f32.mrf.mxu0
      %v1521 = vadd.f32 %v1265, %v1520
      %v1522 = vpop.f32.mrf.mxu0
      %1523 = vmatprep.mubr.f32.mxu0 0.0
      %1524 = vmatmul.mubr.f32.gmra.mxu0 %v1376
      %v1525 = vpop.f32.mrf.mxu0
      %v1526 = vadd.f32 %v1270, %v1525
      %v1527 = vpop.f32.mrf.mxu0
      %1528 = vmatprep.mubr.f32.mxu0 0.0
      %1529 = vmatmul.mubr.f32.gmra.mxu0 %v1378
      %v1530 = vpop.f32.mrf.mxu0
      %v1531 = vadd.f32 %v1275, %v1530
      %v1532 = vpop.f32.mrf.mxu0
      %1533 = vmatprep.mubr.f32.mxu0 0.0
      %1534 = vmatmul.mubr.f32.gmra.mxu0 %v1380
      %v1535 = vpop.f32.mrf.mxu0
      %v1536 = vadd.f32 %v1280, %v1535
      %v1537 = vpop.f32.mrf.mxu0
      %1538 = vmatprep.mubr.f32.mxu0 0.0
      %1539 = vmatmul.mubr.f32.gmra.mxu0 %v1382
      %v1540 = vpop.f32.mrf.mxu0
      %v1541 = vadd.f32 %v1285, %v1540
      %v1542 = vpop.f32.mrf.mxu0
      %1543 = vdwg.mxu0
      %v1544 = vld [vmem:[%s9] sm:$0x1]
      %v1546 = vlaneseq
      %v1547 = vshrl.u32 %v1546, 7
      %v1548 = vsub.s32 0, %v1547
      %v1549 = vrot.slane %v1544, %v1548
      %v1551 = vadd.f32 %v1451, %v1549
      %v1552 = vadd.f32 %v1456, %v1549
      %v1553 = vadd.f32 %v1461, %v1549
      %v1554 = vadd.f32 %v1466, %v1549
      %v1555 = vadd.f32 %v1471, %v1549
      %v1556 = vadd.f32 %v1476, %v1549
      %v1557 = vadd.f32 %v1481, %v1549
      %v1558 = vadd.f32 %v1486, %v1549
      %v1559 = vadd.f32 %v1491, %v1549
      %v1560 = vadd.f32 %v1496, %v1549
      %v1561 = vadd.f32 %v1501, %v1549
      %v1562 = vadd.f32 %v1506, %v1549
      %v1563 = vadd.f32 %v1511, %v1549
      %v1564 = vadd.f32 %v1516, %v1549
      %v1565 = vadd.f32 %v1521, %v1549
      %v1566 = vadd.f32 %v1526, %v1549
      %v1567 = vadd.f32 %v1531, %v1549
      %v1568 = vadd.f32 %v1536, %v1549
      %v1569 = vadd.f32 %v1541, %v1549
      %v1570 = vmax.f32 %v1551, 0.0
      %v1571 = vmax.f32 %v1552, 0.0
      %v1572 = vmax.f32 %v1553, 0.0
      %v1573 = vmax.f32 %v1554, 0.0
      %v1574 = vmax.f32 %v1555, 0.0
      %v1575 = vmax.f32 %v1556, 0.0
      %v1576 = vmax.f32 %v1557, 0.0
      %v1577 = vmax.f32 %v1558, 0.0
      %v1578 = vmax.f32 %v1559, 0.0
      %v1579 = vmax.f32 %v1560, 0.0
      %v1580 = vmax.f32 %v1561, 0.0
      %v1581 = vmax.f32 %v1562, 0.0
      %v1582 = vmax.f32 %v1563, 0.0
      %v1583 = vmax.f32 %v1564, 0.0
      %v1584 = vmax.f32 %v1565, 0.0
      %v1585 = vmax.f32 %v1566, 0.0
      %v1586 = vmax.f32 %v1567, 0.0
      %v1587 = vmax.f32 %v1568, 0.0
      %v1588 = vmax.f32 %v1569, 0.0
      %v1589 = vld [vmem:[%s10] sm:$0xff]
      %v1590 = vld [vmem:[%s10 + $0x8] sm:$0xff]
      %v1591 = vld [vmem:[%s10 + $0x10] sm:$0xff]
      %v1592 = vld [vmem:[%s10 + $0x18] sm:$0xff]
      %v1593 = vld [vmem:[%s11] sm:$0x1]
      %v1595 = vlaneseq
      %v1596 = vshrl.u32 %v1595, 7
      %v1597 = vsub.s32 0, %v1596
      %v1598 = vrot.slane %v1593, %v1597
      %v1601 = vsel %vm716, %v1570, 0
      %v1604 = vsel %vm716, %v1571, 0
      %v1607 = vsel %vm716, %v1572, 0
      %v1610 = vsel %vm716, %v1573, 0
      %v1613 = vsel %vm716, %v1574, 0
      %v1616 = vsel %vm716, %v1575, 0
      %v1619 = vsel %vm716, %v1576, 0
      %v1622 = vsel %vm716, %v1577, 0
      %v1625 = vsel %vm716, %v1578, 0
      %v1628 = vsel %vm716, %v1579, 0
      %v1631 = vsel %vm716, %v1580, 0
      %v1634 = vsel %vm716, %v1581, 0
      %v1637 = vsel %vm716, %v1582, 0
      %v1640 = vsel %vm716, %v1583, 0
      %v1643 = vsel %vm716, %v1584, 0
      %v1646 = vsel %vm716, %v1585, 0
      %v1649 = vsel %vm716, %v1586, 0
      %v1652 = vsel %vm716, %v1587, 0
      %v1655 = vsel %vm716, %v1588, 0
      %1657 = vmatprep.subr.mxu0 0.0
      %1658 = vmatpush1.msra.mxu0 0.0
      %1659 = vmatprep.subr.mxu0 0.0
      %1660 = vmatpush1.msra.mxu0 0.0
      %1661 = vmatprep.subr.mxu0 0.0
      %1662 = vmatpush1.msra.mxu0 0.0
      %1663 = vmatprep.subr.mxu0 0.0
      %1664 = vmatpush1.msra.mxu0 0.0
      %1665 = vmatprep.subr.mxu0 0.0
      %1666 = vmatpush1.msra.mxu0 0.0
      %1667 = vmatprep.subr.mxu0 0.0
      %1668 = vmatpush1.msra.mxu0 0.0
      %1669 = vmatprep.subr.mxu0 0.0
      %1670 = vmatpush1.msra.mxu0 0.0
      %1671 = vmatprep.subr.mxu0 0.0
      %1672 = vmatpush1.msra.mxu0 0.0
      %1673 = vmatprep.subr.mxu0 0.0
      %1674 = vmatpush1.msra.mxu0 0.0
      %1675 = vmatprep.subr.mxu0 0.0
      %1676 = vmatpush1.msra.mxu0 0.0
      %1677 = vmatprep.subr.mxu0 0.0
      %1678 = vmatpush1.msra.mxu0 0.0
      %1679 = vmatprep.subr.mxu0 0.0
      %1680 = vmatpush1.msra.mxu0 0.0
      %1681 = vmatprep.subr.mxu0 0.0
      %1682 = vmatpush1.msra.mxu0 %v1592
      %1683 = vmatprep.subr.mxu0 0.0
      %1684 = vmatpush1.msra.mxu0 %v1591
      %1685 = vmatprep.subr.mxu0 0.0
      %1686 = vmatpush1.msra.mxu0 %v1590
      %1687 = vmatprep.subr.mxu0 0.0
      %1688 = vmatpush1.msra.mxu0 %v1589
      %1689 = vmatprep.subr.mxu0 0.0
      %1690 = vmatpush2.msra.mxu0 0.0
      %1691 = vmatprep.subr.mxu0 0.0
      %1692 = vmatpush2.msra.mxu0 0.0
      %1693 = vmatprep.subr.mxu0 0.0
      %1694 = vmatpush2.msra.mxu0 0.0
      %1695 = vmatprep.subr.mxu0 0.0
      %1696 = vmatpush2.msra.mxu0 0.0
      %1697 = vmatprep.subr.mxu0 0.0
      %1698 = vmatpush2.msra.mxu0 0.0
      %1699 = vmatprep.subr.mxu0 0.0
      %1700 = vmatpush2.msra.mxu0 0.0
      %1701 = vmatprep.subr.mxu0 0.0
      %1702 = vmatpush2.msra.mxu0 0.0
      %1703 = vmatprep.subr.mxu0 0.0
      %1704 = vmatpush2.msra.mxu0 0.0
      %1705 = vmatprep.subr.mxu0 0.0
      %1706 = vmatpush2.msra.mxu0 0.0
      %1707 = vmatprep.subr.mxu0 0.0
      %1708 = vmatpush2.msra.mxu0 0.0
      %1709 = vmatprep.subr.mxu0 0.0
      %1710 = vmatpush2.msra.mxu0 0.0
      %1711 = vmatprep.subr.mxu0 0.0
      %1712 = vmatpush2.msra.mxu0 0.0
      %1713 = vmatprep.subr.mxu0 0.0
      %1714 = vmatpush2.msra.mxu0 0.0
      %1715 = vmatprep.subr.mxu0 0.0
      %1716 = vmatpush2.msra.mxu0 0.0
      %1717 = vmatprep.subr.mxu0 0.0
      %1718 = vmatpush2.msra.mxu0 0.0
      %1719 = vmatprep.subr.mxu0 0.0
      %1720 = vmatpush2.msra.mxu0 0.0
      %1721 = vmatprep.mubr.f32.mxu0 0.0
      %1722 = vmatmul.mubr.f32.gmra.mxu0 %v1601
      %v1723 = vpop.f32.mrf.mxu0
      %v1724 = vadd.f32 %v1598, %v1723
      %v1725 = vpop.f32.mrf.mxu0
      %1726 = vmatprep.mubr.f32.mxu0 0.0
      %1727 = vmatmul.mubr.f32.gmra.mxu0 %v1604
      %v1728 = vpop.f32.mrf.mxu0
      %v1729 = vadd.f32 %v1598, %v1728
      %v1730 = vpop.f32.mrf.mxu0
      %1731 = vmatprep.mubr.f32.mxu0 0.0
      %1732 = vmatmul.mubr.f32.gmra.mxu0 %v1607
      %v1733 = vpop.f32.mrf.mxu0
      %v1734 = vadd.f32 %v1598, %v1733
      %v1735 = vpop.f32.mrf.mxu0
      %1736 = vmatprep.mubr.f32.mxu0 0.0
      %1737 = vmatmul.mubr.f32.gmra.mxu0 %v1610
      %v1738 = vpop.f32.mrf.mxu0
      %v1739 = vadd.f32 %v1598, %v1738
      %v1740 = vpop.f32.mrf.mxu0
      %1741 = vmatprep.mubr.f32.mxu0 0.0
      %1742 = vmatmul.mubr.f32.gmra.mxu0 %v1613
      %v1743 = vpop.f32.mrf.mxu0
      %v1744 = vadd.f32 %v1598, %v1743
      %v1745 = vpop.f32.mrf.mxu0
      %1746 = vmatprep.mubr.f32.mxu0 0.0
      %1747 = vmatmul.mubr.f32.gmra.mxu0 %v1616
      %v1748 = vpop.f32.mrf.mxu0
      %v1749 = vadd.f32 %v1598, %v1748
      %v1750 = vpop.f32.mrf.mxu0
      %1751 = vmatprep.mubr.f32.mxu0 0.0
      %1752 = vmatmul.mubr.f32.gmra.mxu0 %v1619
      %v1753 = vpop.f32.mrf.mxu0
      %v1754 = vadd.f32 %v1598, %v1753
      %v1755 = vpop.f32.mrf.mxu0
      %1756 = vmatprep.mubr.f32.mxu0 0.0
      %1757 = vmatmul.mubr.f32.gmra.mxu0 %v1622
      %v1758 = vpop.f32.mrf.mxu0
      %v1759 = vadd.f32 %v1598, %v1758
      %v1760 = vpop.f32.mrf.mxu0
      %1761 = vmatprep.mubr.f32.mxu0 0.0
      %1762 = vmatmul.mubr.f32.gmra.mxu0 %v1625
      %v1763 = vpop.f32.mrf.mxu0
      %v1764 = vadd.f32 %v1598, %v1763
      %v1765 = vpop.f32.mrf.mxu0
      %1766 = vmatprep.mubr.f32.mxu0 0.0
      %1767 = vmatmul.mubr.f32.gmra.mxu0 %v1628
      %v1768 = vpop.f32.mrf.mxu0
      %v1769 = vadd.f32 %v1598, %v1768
      %v1770 = vpop.f32.mrf.mxu0
      %1771 = vmatprep.mubr.f32.mxu0 0.0
      %1772 = vmatmul.mubr.f32.gmra.mxu0 %v1631
      %v1773 = vpop.f32.mrf.mxu0
      %v1774 = vadd.f32 %v1598, %v1773
      %v1775 = vpop.f32.mrf.mxu0
      %1776 = vmatprep.mubr.f32.mxu0 0.0
      %1777 = vmatmul.mubr.f32.gmra.mxu0 %v1634
      %v1778 = vpop.f32.mrf.mxu0
      %v1779 = vadd.f32 %v1598, %v1778
      %v1780 = vpop.f32.mrf.mxu0
      %1781 = vmatprep.mubr.f32.mxu0 0.0
      %1782 = vmatmul.mubr.f32.gmra.mxu0 %v1637
      %v1783 = vpop.f32.mrf.mxu0
      %v1784 = vadd.f32 %v1598, %v1783
      %v1785 = vpop.f32.mrf.mxu0
      %1786 = vmatprep.mubr.f32.mxu0 0.0
      %1787 = vmatmul.mubr.f32.gmra.mxu0 %v1640
      %v1788 = vpop.f32.mrf.mxu0
      %v1789 = vadd.f32 %v1598, %v1788
      %v1790 = vpop.f32.mrf.mxu0
      %1791 = vmatprep.mubr.f32.mxu0 0.0
      %1792 = vmatmul.mubr.f32.gmra.mxu0 %v1643
      %v1793 = vpop.f32.mrf.mxu0
      %v1794 = vadd.f32 %v1598, %v1793
      %v1795 = vpop.f32.mrf.mxu0
      %1796 = vmatprep.mubr.f32.mxu0 0.0
      %1797 = vmatmul.mubr.f32.gmra.mxu0 %v1646
      %v1798 = vpop.f32.mrf.mxu0
      %v1799 = vadd.f32 %v1598, %v1798
      %v1800 = vpop.f32.mrf.mxu0
      %1801 = vmatprep.mubr.f32.mxu0 0.0
      %1802 = vmatmul.mubr.f32.gmra.mxu0 %v1649
      %v1803 = vpop.f32.mrf.mxu0
      %v1804 = vadd.f32 %v1598, %v1803
      %v1805 = vpop.f32.mrf.mxu0
      %1806 = vmatprep.mubr.f32.mxu0 0.0
      %1807 = vmatmul.mubr.f32.gmra.mxu0 %v1652
      %v1808 = vpop.f32.mrf.mxu0
      %v1809 = vadd.f32 %v1598, %v1808
      %v1810 = vpop.f32.mrf.mxu0
      %1811 = vmatprep.mubr.f32.mxu0 0.0
      %1812 = vmatmul.mubr.f32.gmra.mxu0 %v1655
      %v1813 = vpop.f32.mrf.mxu0
      %v1814 = vadd.f32 %v1598, %v1813
      %v1815 = vpop.f32.mrf.mxu0
      %1816 = vdwg.mxu0
      %v1817 = vsub.f32 0.0, %v1724
      %v1818 = vsub.f32 0.0, %v1729
      %v1819 = vsub.f32 0.0, %v1734
      %v1820 = vsub.f32 0.0, %v1739
      %v1821 = vsub.f32 0.0, %v1744
      %v1822 = vsub.f32 0.0, %v1749
      %v1823 = vsub.f32 0.0, %v1754
      %v1824 = vsub.f32 0.0, %v1759
      %v1825 = vsub.f32 0.0, %v1764
      %v1826 = vsub.f32 0.0, %v1769
      %v1827 = vsub.f32 0.0, %v1774
      %v1828 = vsub.f32 0.0, %v1779
      %v1829 = vsub.f32 0.0, %v1784
      %v1830 = vsub.f32 0.0, %v1789
      %v1831 = vsub.f32 0.0, %v1794
      %v1832 = vsub.f32 0.0, %v1799
      %v1833 = vsub.f32 0.0, %v1804
      %v1834 = vsub.f32 0.0, %v1809
      %v1835 = vsub.f32 0.0, %v1814
      %v1836 = vmul.f32 %v1817, 1.442695
      %v1837 = vpow.pop %v1836
      %v1838 = vmul.f32 %v1818, 1.442695
      %v1839 = vpow.pop %v1838
      %v1840 = vmul.f32 %v1819, 1.442695
      %v1841 = vpow.pop %v1840
      %v1842 = vmul.f32 %v1820, 1.442695
      %v1843 = vpow.pop %v1842
      %v1844 = vmul.f32 %v1821, 1.442695
      %v1845 = vpow.pop %v1844
      %v1846 = vmul.f32 %v1822, 1.442695
      %v1847 = vpow.pop %v1846
      %v1848 = vmul.f32 %v1823, 1.442695
      %v1849 = vpow.pop %v1848
      %v1850 = vmul.f32 %v1824, 1.442695
      %v1851 = vpow.pop %v1850
      %v1852 = vmul.f32 %v1825, 1.442695
      %v1853 = vpow.pop %v1852
      %v1854 = vmul.f32 %v1826, 1.442695
      %v1855 = vpow.pop %v1854
      %v1856 = vmul.f32 %v1827, 1.442695
      %v1857 = vpow.pop %v1856
      %v1858 = vmul.f32 %v1828, 1.442695
      %v1859 = vpow.pop %v1858
      %v1860 = vmul.f32 %v1829, 1.442695
      %v1861 = vpow.pop %v1860
      %v1862 = vmul.f32 %v1830, 1.442695
      %v1863 = vpow.pop %v1862
      %v1864 = vmul.f32 %v1831, 1.442695
      %v1865 = vpow.pop %v1864
      %v1866 = vmul.f32 %v1832, 1.442695
      %v1867 = vpow.pop %v1866
      %v1868 = vmul.f32 %v1833, 1.442695
      %v1869 = vpow.pop %v1868
      %v1870 = vmul.f32 %v1834, 1.442695
      %v1871 = vpow.pop %v1870
      %v1872 = vmul.f32 %v1835, 1.442695
      %v1873 = vpow.pop %v1872
      %v1874 = vadd.f32 %v1837, 1.0
      %v1875 = vadd.f32 %v1839, 1.0
      %v1876 = vadd.f32 %v1841, 1.0
      %v1877 = vadd.f32 %v1843, 1.0
      %v1878 = vadd.f32 %v1845, 1.0
      %v1879 = vadd.f32 %v1847, 1.0
      %v1880 = vadd.f32 %v1849, 1.0
      %v1881 = vadd.f32 %v1851, 1.0
      %v1882 = vadd.f32 %v1853, 1.0
      %v1883 = vadd.f32 %v1855, 1.0
      %v1884 = vadd.f32 %v1857, 1.0
      %v1885 = vadd.f32 %v1859, 1.0
      %v1886 = vadd.f32 %v1861, 1.0
      %v1887 = vadd.f32 %v1863, 1.0
      %v1888 = vadd.f32 %v1865, 1.0
      %v1889 = vadd.f32 %v1867, 1.0
      %v1890 = vadd.f32 %v1869, 1.0
      %v1891 = vadd.f32 %v1871, 1.0
      %v1892 = vadd.f32 %v1873, 1.0
      %v1893 = vrcp.pop %v1874
      %v1894 = vmul.f32 1.0, %v1893
      %v1895 = vrcp.pop %v1875
      %v1896 = vmul.f32 1.0, %v1895
      %v1897 = vrcp.pop %v1876
      %v1898 = vmul.f32 1.0, %v1897
      %v1899 = vrcp.pop %v1877
      %v1900 = vmul.f32 1.0, %v1899
      %v1901 = vrcp.pop %v1878
      %v1902 = vmul.f32 1.0, %v1901
      %v1903 = vrcp.pop %v1879
      %v1904 = vmul.f32 1.0, %v1903
      %v1905 = vrcp.pop %v1880
      %v1906 = vmul.f32 1.0, %v1905
      %v1907 = vrcp.pop %v1881
      %v1908 = vmul.f32 1.0, %v1907
      %v1909 = vrcp.pop %v1882
      %v1910 = vmul.f32 1.0, %v1909
      %v1911 = vrcp.pop %v1883
      %v1912 = vmul.f32 1.0, %v1911
      %v1913 = vrcp.pop %v1884
      %v1914 = vmul.f32 1.0, %v1913
      %v1915 = vrcp.pop %v1885
      %v1916 = vmul.f32 1.0, %v1915
      %v1917 = vrcp.pop %v1886
      %v1918 = vmul.f32 1.0, %v1917
      %v1919 = vrcp.pop %v1887
      %v1920 = vmul.f32 1.0, %v1919
      %v1921 = vrcp.pop %v1888
      %v1922 = vmul.f32 1.0, %v1921
      %v1923 = vrcp.pop %v1889
      %v1924 = vmul.f32 1.0, %v1923
      %v1925 = vrcp.pop %v1890
      %v1926 = vmul.f32 1.0, %v1925
      %v1927 = vrcp.pop %v1891
      %v1928 = vmul.f32 1.0, %v1927
      %v1929 = vrcp.pop %v1892
      %v1930 = vmul.f32 1.0, %v1929
      %v1931 = vld [vmem:[%s2] sm:$0x1]
      %v1933 = vlaneseq
      %v1934 = vshrl.u32 %v1933, 7
      %v1935 = vsub.s32 0, %v1934
      %v1936 = vrot.slane %v1931, %v1935
      %v1938 = vmul.f32 %v1936, %v1894
      %v1939 = vmul.f32 %v1936, %v1896
      %v1940 = vmul.f32 %v1936, %v1898
      %v1941 = vmul.f32 %v1936, %v1900
      %v1942 = vmul.f32 %v1936, %v1902
      %v1943 = vmul.f32 %v1936, %v1904
      %v1944 = vmul.f32 %v1936, %v1906
      %v1945 = vmul.f32 %v1936, %v1908
      %v1946 = vmul.f32 %v1936, %v1910
      %v1947 = vmul.f32 %v1936, %v1912
      %v1948 = vmul.f32 %v1936, %v1914
      %v1949 = vmul.f32 %v1936, %v1916
      %v1950 = vmul.f32 %v1936, %v1918
      %v1951 = vmul.f32 %v1936, %v1920
      %v1952 = vmul.f32 %v1936, %v1922
      %v1953 = vmul.f32 %v1936, %v1924
      %v1954 = vmul.f32 %v1936, %v1926
      %v1955 = vmul.f32 %v1936, %v1928
      %v1956 = vmul.f32 %v1936, %v1930
      %v1957 = vsub.f32 1.0, %v1931
      %v1959 = vlaneseq
      %v1960 = vshrl.u32 %v1959, 7
      %v1961 = vsub.s32 0, %v1960
      %v1962 = vrot.slane %v1957, %v1961
      %v1964 = vmul.f32 %v1962, %v439
      %v1965 = vmul.f32 %v1962, %v440
      %v1966 = vmul.f32 %v1962, %v441
      %v1967 = vmul.f32 %v1962, %v442
      %v1968 = vmul.f32 %v1962, %v443
      %v1969 = vmul.f32 %v1962, %v444
      %v1970 = vmul.f32 %v1962, %v445
      %v1971 = vmul.f32 %v1962, %v446
      %v1972 = vmul.f32 %v1962, %v447
      %v1973 = vmul.f32 %v1962, %v448
      %v1974 = vmul.f32 %v1962, %v449
      %v1975 = vmul.f32 %v1962, %v450
      %v1976 = vmul.f32 %v1962, %v451
      %v1977 = vmul.f32 %v1962, %v452
      %v1978 = vmul.f32 %v1962, %v453
      %v1979 = vmul.f32 %v1962, %v454
      %v1980 = vmul.f32 %v1962, %v455
      %v1981 = vmul.f32 %v1962, %v456
      %v1982 = vmul.f32 %v1962, %v457
      %v1983 = vadd.f32 %v1938, %v1964
      %v1984 = vadd.f32 %v1939, %v1965
      %v1985 = vadd.f32 %v1940, %v1966
      %v1986 = vadd.f32 %v1941, %v1967
      %v1987 = vadd.f32 %v1942, %v1968
      %v1988 = vadd.f32 %v1943, %v1969
      %v1989 = vadd.f32 %v1944, %v1970
      %v1990 = vadd.f32 %v1945, %v1971
      %v1991 = vadd.f32 %v1946, %v1972
      %v1992 = vadd.f32 %v1947, %v1973
      %v1993 = vadd.f32 %v1948, %v1974
      %v1994 = vadd.f32 %v1949, %v1975
      %v1995 = vadd.f32 %v1950, %v1976
      %v1996 = vadd.f32 %v1951, %v1977
      %v1997 = vadd.f32 %v1952, %v1978
      %v1998 = vadd.f32 %v1953, %v1979
      %v1999 = vadd.f32 %v1954, %v1980
      %v2000 = vadd.f32 %v1955, %v1981
      %v2001 = vadd.f32 %v1956, %v1982
      %2002 = vst.msk [vmem:[%s437] sm:$0xff] %vm468, %v1983
      %2003 = vst.msk [vmem:[%s437 + $0x8] sm:$0xff] %vm468, %v1984
      %2004 = vst.msk [vmem:[%s437 + $0x10] sm:$0xff] %vm468, %v1985
      %2005 = vst.msk [vmem:[%s437 + $0x18] sm:$0xff] %vm468, %v1986
      %2006 = vst.msk [vmem:[%s437 + $0x20] sm:$0xff] %vm468, %v1987
      %2007 = vst.msk [vmem:[%s437 + $0x28] sm:$0xff] %vm468, %v1988
      %2008 = vst.msk [vmem:[%s437 + $0x30] sm:$0xff] %vm468, %v1989
      %2009 = vst.msk [vmem:[%s437 + $0x38] sm:$0xff] %vm468, %v1990
      %2010 = vst.msk [vmem:[%s437 + $0x40] sm:$0xff] %vm468, %v1991
      %2011 = vst.msk [vmem:[%s437 + $0x48] sm:$0xff] %vm468, %v1992
      %2012 = vst.msk [vmem:[%s437 + $0x50] sm:$0xff] %vm468, %v1993
      %2013 = vst.msk [vmem:[%s437 + $0x58] sm:$0xff] %vm468, %v1994
      %2014 = vst.msk [vmem:[%s437 + $0x60] sm:$0xff] %vm468, %v1995
      %2015 = vst.msk [vmem:[%s437 + $0x68] sm:$0xff] %vm468, %v1996
      %2016 = vst.msk [vmem:[%s437 + $0x70] sm:$0xff] %vm468, %v1997
      %2017 = vst.msk [vmem:[%s437 + $0x78] sm:$0xff] %vm468, %v1998
      %2018 = vst.msk [vmem:[%s437 + $0x80] sm:$0xff] %vm468, %v1999
      %2019 = vst.msk [vmem:[%s437 + $0x88] sm:$0xff] %vm468, %v2000
      %2020 = vst.msk [vmem:[%s437 + $0x90] sm:$0xff] %vm468, %v2001
      %2040 = vrot.lane.b32.xlu0 %v841, 16
      %v2041 = vpop.permute.xlu0 %2040
      %2042 = vrot.lane.b32.xlu0 %v846, 16
      %v2043 = vpop.permute.xlu0 %2042
      %2044 = vrot.lane.b32.xlu0 %v851, 16
      %v2045 = vpop.permute.xlu0 %2044
      %2046 = vrot.lane.b32.xlu0 %v856, 16
      %v2047 = vpop.permute.xlu0 %2046
      %2048 = vrot.lane.b32.xlu0 %v861, 16
      %v2049 = vpop.permute.xlu0 %2048
      %2050 = vrot.lane.b32.xlu0 %v866, 16
      %v2051 = vpop.permute.xlu0 %2050
      %2052 = vrot.lane.b32.xlu0 %v871, 16
      %v2053 = vpop.permute.xlu0 %2052
      %2054 = vrot.lane.b32.xlu0 %v876, 16
      %v2055 = vpop.permute.xlu0 %2054
      %2056 = vrot.lane.b32.xlu0 %v881, 16
      %v2057 = vpop.permute.xlu0 %2056
      %2058 = vrot.lane.b32.xlu0 %v886, 16
      %v2059 = vpop.permute.xlu0 %2058
      %2060 = vrot.lane.b32.xlu0 %v891, 16
      %v2061 = vpop.permute.xlu0 %2060
      %2062 = vrot.lane.b32.xlu0 %v896, 16
      %v2063 = vpop.permute.xlu0 %2062
      %2064 = vrot.lane.b32.xlu0 %v901, 16
      %v2065 = vpop.permute.xlu0 %2064
      %2066 = vrot.lane.b32.xlu0 %v906, 16
      %v2067 = vpop.permute.xlu0 %2066
      %2068 = vrot.lane.b32.xlu0 %v911, 16
      %v2069 = vpop.permute.xlu0 %2068
      %2070 = vrot.lane.b32.xlu0 %v916, 16
      %v2071 = vpop.permute.xlu0 %2070
      %2072 = vrot.lane.b32.xlu0 %v921, 16
      %v2073 = vpop.permute.xlu0 %2072
      %2074 = vrot.lane.b32.xlu0 %v926, 16
      %v2075 = vpop.permute.xlu0 %2074
      %2076 = vrot.lane.b32.xlu0 %v931, 16
      %v2077 = vpop.permute.xlu0 %2076
      %vm2097 = vcmask 261312
      %2098 = vst.msk [vmem:[%s437] sm:$0xff] %vm2097, %v2041
      %2099 = vst.msk [vmem:[%s437 + $0x8] sm:$0xff] %vm2097, %v2043
      %2100 = vst.msk [vmem:[%s437 + $0x10] sm:$0xff] %vm2097, %v2045
      %2101 = vst.msk [vmem:[%s437 + $0x18] sm:$0xff] %vm2097, %v2047
      %2102 = vst.msk [vmem:[%s437 + $0x20] sm:$0xff] %vm2097, %v2049
      %2103 = vst.msk [vmem:[%s437 + $0x28] sm:$0xff] %vm2097, %v2051
      %2104 = vst.msk [vmem:[%s437 + $0x30] sm:$0xff] %vm2097, %v2053
      %2105 = vst.msk [vmem:[%s437 + $0x38] sm:$0xff] %vm2097, %v2055
      %2106 = vst.msk [vmem:[%s437 + $0x40] sm:$0xff] %vm2097, %v2057
      %2107 = vst.msk [vmem:[%s437 + $0x48] sm:$0xff] %vm2097, %v2059
      %2108 = vst.msk [vmem:[%s437 + $0x50] sm:$0xff] %vm2097, %v2061
      %2109 = vst.msk [vmem:[%s437 + $0x58] sm:$0xff] %vm2097, %v2063
      %2110 = vst.msk [vmem:[%s437 + $0x60] sm:$0xff] %vm2097, %v2065
      %2111 = vst.msk [vmem:[%s437 + $0x68] sm:$0xff] %vm2097, %v2067
      %2112 = vst.msk [vmem:[%s437 + $0x70] sm:$0xff] %vm2097, %v2069
      %2113 = vst.msk [vmem:[%s437 + $0x78] sm:$0xff] %vm2097, %v2071
      %2114 = vst.msk [vmem:[%s437 + $0x80] sm:$0xff] %vm2097, %v2073
      %2115 = vst.msk [vmem:[%s437 + $0x88] sm:$0xff] %vm2097, %v2075
      %2116 = vst.msk [vmem:[%s437 + $0x90] sm:$0xff] %vm2097, %v2077
      %2117 = vrot.lane.b32.xlu0 %v841, 32
      %v2118 = vpop.permute.xlu0 %2117
      %2119 = vrot.lane.b32.xlu0 %v846, 32
      %v2120 = vpop.permute.xlu0 %2119
      %2121 = vrot.lane.b32.xlu0 %v851, 32
      %v2122 = vpop.permute.xlu0 %2121
      %2123 = vrot.lane.b32.xlu0 %v856, 32
      %v2124 = vpop.permute.xlu0 %2123
      %2125 = vrot.lane.b32.xlu0 %v861, 32
      %v2126 = vpop.permute.xlu0 %2125
      %2127 = vrot.lane.b32.xlu0 %v866, 32
      %v2128 = vpop.permute.xlu0 %2127
      %2129 = vrot.lane.b32.xlu0 %v871, 32
      %v2130 = vpop.permute.xlu0 %2129
      %2131 = vrot.lane.b32.xlu0 %v876, 32
      %v2132 = vpop.permute.xlu0 %2131
      %2133 = vrot.lane.b32.xlu0 %v881, 32
      %v2134 = vpop.permute.xlu0 %2133
      %2135 = vrot.lane.b32.xlu0 %v886, 32
      %v2136 = vpop.permute.xlu0 %2135
      %2137 = vrot.lane.b32.xlu0 %v891, 32
      %v2138 = vpop.permute.xlu0 %2137
      %2139 = vrot.lane.b32.xlu0 %v896, 32
      %v2140 = vpop.permute.xlu0 %2139
      %2141 = vrot.lane.b32.xlu0 %v901, 32
      %v2142 = vpop.permute.xlu0 %2141
      %2143 = vrot.lane.b32.xlu0 %v906, 32
      %v2144 = vpop.permute.xlu0 %2143
      %2145 = vrot.lane.b32.xlu0 %v911, 32
      %v2146 = vpop.permute.xlu0 %2145
      %2147 = vrot.lane.b32.xlu0 %v916, 32
      %v2148 = vpop.permute.xlu0 %2147
      %2149 = vrot.lane.b32.xlu0 %v921, 32
      %v2150 = vpop.permute.xlu0 %2149
      %2151 = vrot.lane.b32.xlu0 %v926, 32
      %v2152 = vpop.permute.xlu0 %2151
      %2153 = vrot.lane.b32.xlu0 %v931, 32
      %v2154 = vpop.permute.xlu0 %2153
      %vm2174 = vcmask 326912
      %2175 = vst.msk [vmem:[%s437] sm:$0xff] %vm2174, %v2118
      %2176 = vst.msk [vmem:[%s437 + $0x8] sm:$0xff] %vm2174, %v2120
      %2177 = vst.msk [vmem:[%s437 + $0x10] sm:$0xff] %vm2174, %v2122
      %2178 = vst.msk [vmem:[%s437 + $0x18] sm:$0xff] %vm2174, %v2124
      %2179 = vst.msk [vmem:[%s437 + $0x20] sm:$0xff] %vm2174, %v2126
      %2180 = vst.msk [vmem:[%s437 + $0x28] sm:$0xff] %vm2174, %v2128
      %2181 = vst.msk [vmem:[%s437 + $0x30] sm:$0xff] %vm2174, %v2130
      %2182 = vst.msk [vmem:[%s437 + $0x38] sm:$0xff] %vm2174, %v2132
      %2183 = vst.msk [vmem:[%s437 + $0x40] sm:$0xff] %vm2174, %v2134
      %2184 = vst.msk [vmem:[%s437 + $0x48] sm:$0xff] %vm2174, %v2136
      %2185 = vst.msk [vmem:[%s437 + $0x50] sm:$0xff] %vm2174, %v2138
      %2186 = vst.msk [vmem:[%s437 + $0x58] sm:$0xff] %vm2174, %v2140
      %2187 = vst.msk [vmem:[%s437 + $0x60] sm:$0xff] %vm2174, %v2142
      %2188 = vst.msk [vmem:[%s437 + $0x68] sm:$0xff] %vm2174, %v2144
      %2189 = vst.msk [vmem:[%s437 + $0x70] sm:$0xff] %vm2174, %v2146
      %2190 = vst.msk [vmem:[%s437 + $0x78] sm:$0xff] %vm2174, %v2148
      %2191 = vst.msk [vmem:[%s437 + $0x80] sm:$0xff] %vm2174, %v2150
      %2192 = vst.msk [vmem:[%s437 + $0x88] sm:$0xff] %vm2174, %v2152
      %2193 = vst.msk [vmem:[%s437 + $0x90] sm:$0xff] %vm2174, %v2154
      %s2194 = smul.u32 19, %s23
      %p2195 = scmp.lt.s32.totalorder %s2194, 37
      %s2196 = scalar_select %p2195, %s2194, 37
      %s2197 = smul.addr %s2196, 8
      %s2198 = scalar_lea.vmem %s12, %s2197
      // Predicated region
      $region69: #{vae_forward.1} parent=67 // pred_check
        %p2199 = pneg %p303
      $region70: #{vae_forward.1} parent=67 // pred_check_branch
        %2201 = sbr.rel (%p2199) target = $region72
      $region71: #{vae_forward.1} parent=67 // pred_region
        %s2202 = smul.u32 19, %s23
      $region72: #{vae_forward.1} parent=67 // pred_fallthru
        _
    $region68: #{vae_forward.1} parent=5 // pred_fallthru
      _
    %p2203 = scmp.le.s32.totalorder 2, %s18
    // Predicated region
    $region73: #{vae_forward.1} parent=5 // pred_check
      %p2204 = pneg %p2203
    $region74: #{vae_forward.1} parent=5 // pred_check_branch
      %2206 = sbr.rel (%p2204) target = $region76
    $region75: #{vae_forward.1} parent=5 // pred_region
      %s2207 = ssub.s32 %s18, 2
      // Predicated region
      $region77: #{vae_forward.1} parent=75 // pred_check
        %p2208 = pneg %p309
      $region78: #{vae_forward.1} parent=75 // pred_check_branch
        %2210 = sbr.rel (%p2208) target = $region80
      $region79: #{vae_forward.1} parent=75 // pred_region
        %s2211 = smul.u32 19, %s24
        %p2212 = scmp.lt.s32.totalorder %s2211, 37
        %s2213 = scalar_select %p2212, %s2211, 37
        %s2214 = smul.addr %s2213, 8
        %s2215 = scalar_lea.vmem %s12, %s2214
      $region80: #{vae_forward.1} parent=75 // pred_fallthru
        _
    $region76: #{vae_forward.1} parent=5 // pred_fallthru
      _
  $region6: #{vae_forward.1} parent=0 // loop_footer
    %s22 = sadd.s32 1, %s18
  $region7: #{vae_forward.1} parent=0 // loop_footer_branch
    %17 = sbr.rel target = $region3
  $region8: #{vae_forward.1} parent=0 // loop_exit
    _

</llo_original>
